<compile_context>
chip_gen: v5e
topology: v5e:2x2
jax: 0.10.0
libtpu: 0.0.40
codegen_flags: <defaults>
</compile_context>

<pallas_src>
import functools

import jax
import jax.numpy as jnp
from jax.experimental import pallas as pl
from jax.experimental.pallas import tpu as pltpu


def _round_up(v, m):
    return ((v + m - 1) // m) * m


def sage_kernel(adj_ref, invdeg_ref, xk_ref, xm_ref, wcat_ref, b_ref,
                o_ref, acc_ref, *, c_in):
    """One (row-tile i, contraction-tile k) grid step.

    adj_ref   : [TM, TK]           int8 (0/1) adjacency tile
    invdeg_ref: [TM, 1]            f32 1/degree for this row tile
    xk_ref    : [TK, C_in]         bf16 neighbor features (contraction slice)
    xm_ref    : [TM, C_in]         f32 root features of this row tile
    wcat_ref  : [2*C_in, C_out_p]  f32 [W ; W_root], lane-padded
    b_ref     : [1, C_out_p]       f32 bias, lane-padded
    o_ref     : [TM, C_out_p]      f32 output tile (resident across k)
    acc_ref   : [TM, 2*C_in]       f32 scratch: [:, :C_in] neighbor-sum acc,
                                   [:, C_in:] root features (written at k==0)
    """
    k = pl.program_id(1)
    tm = acc_ref.shape[0]

    @pl.when(k == 0)
    def _():
        acc_ref[:, :c_in] = jnp.zeros((tm, c_in), jnp.float32)
        acc_ref[:, c_in:] = xm_ref[...]

    # Native bf16 x bf16 MXU pass with f32 accumulation. The int8 adjacency is
    # exact in bf16; the two-step convert (i8 -> f32 -> bf16) uses guaranteed
    # lowering paths and is VPU filler hidden under the DMA in this
    # memory-bound regime.
    adj_bf16 = adj_ref[...].astype(jnp.float32).astype(jnp.bfloat16)
    acc_ref[:, :c_in] += jnp.dot(adj_bf16, xk_ref[...],
                                 preferred_element_type=jnp.float32)

    @pl.when(k == pl.num_programs(1) - 1)
    def _():
        # Mean aggregation, scaled in place so the fused K=2*C_in projection
        # can read the scratch directly (no lane-dim concatenate copy).
        acc_ref[:, :c_in] = acc_ref[:, :c_in] * invdeg_ref[...]
        out = jnp.dot(acc_ref[...], wcat_ref[...],
                      preferred_element_type=jnp.float32)
        o_ref[...] = (out + b_ref[...]).astype(o_ref.dtype)


def l_sage_forward(adj, inv_deg, x, weight, root_weight, bias,
                   *, tm=512, tk=1024):
    """out = ((adj @ x) * inv_deg) @ weight + x @ root_weight + bias."""
    N, c_in = x.shape
    c_out = weight.shape[1]
    c_in_pad = _round_up(c_in, 128)           # lane-aligned feature width
    c_out_pad = _round_up(c_out, 128)         # lane-dense output width

    # Clamp tiles to the problem; keep >= 2 row tiles when possible so the
    # "parallel" row axis can shard across both TensorCores on v7x.
    tm = int(min(tm, max(128, _round_up(pl.cdiv(N, 2), 128))))
    tk = int(min(tk, _round_up(N, 256)))

    # Rectangular padding: rows to a multiple of tm, contraction cols to tk.
    n_rows = _round_up(N, tm)
    n_cols = _round_up(N, tk)

    # Adjacency stored as int8 (exact 0/1) -> halves the dominant O(N^2) HBM
    # stream vs bf16; upcast to bf16 happens in-kernel right before the dot.
    adj_p = jnp.zeros((n_rows, n_cols), jnp.int8)
    adj_p = adj_p.at[:N, :N].set(adj.astype(jnp.int8))

    # x as the bf16 contraction operand (re-fetched once per row tile) and as
    # the f32 root-features operand (fetched once total).
    xk_p = jnp.zeros((n_cols, c_in_pad), jnp.bfloat16)
    xk_p = xk_p.at[:N, :c_in].set(x.astype(jnp.bfloat16))
    xm_p = jnp.zeros((n_rows, c_in_pad), jnp.float32).at[:N, :c_in].set(x)
    invdeg_p = jnp.zeros((n_rows, 1), jnp.float32).at[:N, :].set(inv_deg)

    # Fused projection weights: [2*C_in_pad, C_out_pad], W on top, W_root below.
    w_cat = jnp.zeros((2 * c_in_pad, c_out_pad), jnp.float32)
    w_cat = w_cat.at[:c_in, :c_out].set(weight)
    w_cat = w_cat.at[c_in_pad:c_in_pad + c_in, :c_out].set(root_weight)
    bias_p = jnp.zeros((1, c_out_pad), jnp.float32).at[0, :c_out].set(bias)

    grid = (n_rows // tm, n_cols // tk)

    # Scoped-VMEM budget: double-buffered tile footprint + headroom, kept well
    # under v7x's 64 MiB physical per-TC VMEM.
    tile_bytes = 2 * (tm * tk * 1                     # adj int8
                      + tk * c_in_pad * 2             # xk bf16
                      + tm * c_in_pad * 4             # xm f32
                      + tm * 4                        # inv_deg
                      + 2 * c_in_pad * c_out_pad * 4  # w_cat
                      + c_out_pad * 4                 # bias
                      + tm * c_out_pad * 4)           # out f32
    tile_bytes += tm * 2 * c_in_pad * 4               # acc scratch
    vmem_limit = int(min(max(tile_bytes + (4 << 20), 16 << 20), 48 << 20))

    kernel = functools.partial(sage_kernel, c_in=c_in_pad)

    out_padded = pl.pallas_call(
        kernel,
        out_shape=jax.ShapeDtypeStruct((n_rows, c_out_pad), jnp.float32),
        grid_spec=pltpu.PrefetchScalarGridSpec(
            num_scalar_prefetch=0,
            grid=grid,
            in_specs=[
                pl.BlockSpec((tm, tk), lambda i, k: (i, k)),            # adj
                pl.BlockSpec((tm, 1), lambda i, k: (i, 0)),             # 1/deg
                pl.BlockSpec((tk, c_in_pad), lambda i, k: (k, 0)),      # x (K)
                pl.BlockSpec((tm, c_in_pad), lambda i, k: (i, 0)),      # x (row)
                pl.BlockSpec((2 * c_in_pad, c_out_pad), lambda i, k: (0, 0)),
                pl.BlockSpec((1, c_out_pad), lambda i, k: (0, 0)),
            ],
            out_specs=pl.BlockSpec((tm, c_out_pad), lambda i, k: (i, 0)),
            scratch_shapes=[pltpu.VMEM((tm, 2 * c_in_pad), jnp.float32)],
        ),
        compiler_params=pltpu.CompilerParams(
            dimension_semantics=("parallel", "arbitrary"),
            vmem_limit_bytes=vmem_limit,
        ),
    )(adj_p, invdeg_p, xk_p, xm_p, w_cat, bias_p)

    return out_padded[:N, :c_out]


def glorot(key, shape):
    fan_in, fan_out = shape
    limit = jnp.sqrt(6.0 / (fan_in + fan_out))
    return jax.random.uniform(key, shape, jnp.float32, -limit, limit)


if __name__ == "__main__":
    key = jax.random.PRNGKey(0)
    k_x, k_w, k_wr, k_e = jax.random.split(key, 4)

    # Small synthetic graph standing in for ogbn-arxiv.
    N = 512          # number of nodes (exercises a (2, 1) grid after clamping)
    C_IN = 128       # in_channels (arxiv feature dim)
    C_OUT = 40       # out_channels (arxiv class count)
    NUM_E = 4096     # directed edges before symmetrization

    # Node features.
    x = jax.random.normal(k_x, (N, C_IN), jnp.float32)

    # Random edge_index -> undirected dense adjacency (to_undirected + SparseTensor).
    src = jax.random.randint(k_e, (NUM_E,), 0, N)
    dst = jax.random.randint(jax.random.fold_in(k_e, 1), (NUM_E,), 0, N)
    adj = jnp.zeros((N, N), jnp.float32)
    adj = adj.at[src, dst].set(1.0)
    adj = jnp.maximum(adj, adj.T)                      # undirected
    deg = adj.sum(axis=1, keepdims=True)               # [N, 1]
    inv_deg = jnp.where(deg > 0, 1.0 / jnp.maximum(deg, 1.0), 0.0).astype(jnp.float32)

    # Parameters (glorot / zeros, matching reset_parameters()).
    weight = glorot(k_w, (C_IN, C_OUT))
    root_weight = glorot(k_wr, (C_IN, C_OUT))
    bias = jnp.zeros((C_OUT,), jnp.float32)

    out = l_sage_forward(adj, inv_deg, x, weight, root_weight, bias)
    out = jax.block_until_ready(out)

    # Pure-JAX reference check of the same semantics.
    ref = ((adj @ x) * inv_deg) @ weight + x @ root_weight + bias
    assert out.shape == (N, C_OUT), f"bad output shape {out.shape}"
    # Tolerance accounts for the deliberate bf16 rounding of x in the
    # aggregation matmul (f32 accumulation retained).
    assert jnp.allclose(out, ref, atol=1e-2, rtol=1e-2), "mismatch vs reference"

    print("KERNEL_OK")
</pallas_src>

<mosaic_0001>
module attributes {stable_mosaic.version = 11 : i64} {
  func.func @sage_kernel(%arg0: i32, %arg1: i32, %arg2: memref<256x512xi8, #tpu.memory_space<vmem>>, %arg3: memref<256x1xf32, #tpu.memory_space<vmem>>, %arg4: memref<512x128xbf16, #tpu.memory_space<vmem>>, %arg5: memref<256x128xf32, #tpu.memory_space<vmem>>, %arg6: memref<256x128xf32, #tpu.memory_space<vmem>>, %arg7: memref<1x128xf32, #tpu.memory_space<vmem>>, %arg8: memref<256x128xf32, #tpu.memory_space<vmem>>, %arg9: memref<256x256xf32, #tpu.memory_space<vmem>>) attributes {dimension_semantics = [#tpu.dimension_semantics<parallel>, #tpu.dimension_semantics<arbitrary>], iteration_bounds = array<i64: 2, 1>, scalar_prefetch = 0 : i64, scratch_operands = 1 : i64, tpu.core_type = #tpu.core_type<tc>, window_params = [{transform_indices = @transform_0, window_bounds = array<i64: 256, 512>}, {transform_indices = @transform_1, window_bounds = array<i64: 256, 1>}, {transform_indices = @transform_2, window_bounds = array<i64: 512, 128>}, {transform_indices = @transform_3, window_bounds = array<i64: 256, 128>}, {pipeline_mode = #tpu.pipeline_mode<synchronous>, transform_indices = @transform_4, window_bounds = array<i64: 256, 128>}, {pipeline_mode = #tpu.pipeline_mode<synchronous>, transform_indices = @transform_5, window_bounds = array<i64: 1, 128>}, {transform_indices = @transform_6, window_bounds = array<i64: 256, 128>}]} {
    %c0_i32 = arith.constant 0 : i32
    %0 = arith.cmpi eq, %arg1, %c0_i32 : i32
    %1 = arith.extui %0 : i1 to i32
    %c0_i32_0 = arith.constant 0 : i32
    %2 = arith.cmpi ne, %1, %c0_i32_0 : i32
    scf.if %2 {
      %cst_10 = arith.constant 0.000000e+00 : f32
      %14 = vector.broadcast %cst_10 : f32 to vector<256x128xf32>
      %c0_11 = arith.constant 0 : index
      %c0_12 = arith.constant 0 : index
      %15 = vector.load %arg9[%c0_11, %c0_12] : memref<256x256xf32, #tpu.memory_space<vmem>>, vector<256x128xf32>
      tpu.vector_store %arg9[%c0_11, %c0_12], %14 {strides = array<i32>} : memref<256x256xf32, #tpu.memory_space<vmem>>, vector<256x128xf32>,
      %c0_13 = arith.constant 0 : index
      %c0_14 = arith.constant 0 : index
      %16 = vector.load %arg5[%c0_13, %c0_14] : memref<256x128xf32, #tpu.memory_space<vmem>>, vector<256x128xf32>
      %c0_15 = arith.constant 0 : index
      %c128 = arith.constant 128 : index
      %17 = vector.load %arg9[%c0_15, %c128] : memref<256x256xf32, #tpu.memory_space<vmem>>, vector<256x128xf32>
      tpu.vector_store %arg9[%c0_15, %c128], %16 {strides = array<i32>} : memref<256x256xf32, #tpu.memory_space<vmem>>, vector<256x128xf32>,
    } else {
    }
    %c0 = arith.constant 0 : index
    %c0_1 = arith.constant 0 : index
    %3 = vector.load %arg2[%c0, %c0_1] : memref<256x512xi8, #tpu.memory_space<vmem>>, vector<256x512xi8>
    %4 = arith.sitofp %3 : vector<256x512xi8> to vector<256x512xf32>
    %5 = arith.truncf %4 : vector<256x512xf32> to vector<256x512xbf16>
    %c0_2 = arith.constant 0 : index
    %c0_3 = arith.constant 0 : index
    %6 = vector.load %arg9[%c0_2, %c0_3] : memref<256x256xf32, #tpu.memory_space<vmem>>, vector<256x128xf32>
    %c0_4 = arith.constant 0 : index
    %c0_5 = arith.constant 0 : index
    %7 = vector.load %arg4[%c0_4, %c0_5] : memref<512x128xbf16, #tpu.memory_space<vmem>>, vector<512x128xbf16>
    %cst = arith.constant dense<0.000000e+00> : vector<256x128xf32>
    %8 = tpu.matmul %5, %7, %cst {dimension_numbers = #tpu.dot_dimension_numbers<[1], [0], [0], [1], [0, 0, 1, 1], [], []>} : vector<256x512xbf16>, vector<512x128xbf16>, vector<256x128xf32> -> vector<256x128xf32>
    %9 = arith.addf %6, %8 : vector<256x128xf32>
    %c0_6 = arith.constant 0 : index
    %c0_7 = arith.constant 0 : index
    %10 = vector.load %arg9[%c0_6, %c0_7] : memref<256x256xf32, #tpu.memory_space<vmem>>, vector<256x128xf32>
    tpu.vector_store %arg9[%c0_6, %c0_7], %9 {strides = array<i32>} : memref<256x256xf32, #tpu.memory_space<vmem>>, vector<256x128xf32>,
    %c0_i32_8 = arith.constant 0 : i32
    %11 = arith.cmpi eq, %arg1, %c0_i32_8 : i32
    %12 = arith.extui %11 : i1 to i32
    %c0_i32_9 = arith.constant 0 : i32
    %13 = arith.cmpi ne, %12, %c0_i32_9 : i32
    scf.if %13 {
      %c0_10 = arith.constant 0 : index
      %c0_11 = arith.constant 0 : index
      %14 = vector.load %arg9[%c0_10, %c0_11] : memref<256x256xf32, #tpu.memory_space<vmem>>, vector<256x128xf32>
      %c0_12 = arith.constant 0 : index
      %c0_13 = arith.constant 0 : index
      %15 = vector.load %arg3[%c0_12, %c0_13] : memref<256x1xf32, #tpu.memory_space<vmem>>, vector<256x1xf32>
      %16 = vector.broadcast %15 : vector<256x1xf32> to vector<256x128xf32>
      %17 = arith.mulf %14, %16 : vector<256x128xf32>
      %c0_14 = arith.constant 0 : index
      %c0_15 = arith.constant 0 : index
      %18 = vector.load %arg9[%c0_14, %c0_15] : memref<256x256xf32, #tpu.memory_space<vmem>>, vector<256x128xf32>
      tpu.vector_store %arg9[%c0_14, %c0_15], %17 {strides = array<i32>} : memref<256x256xf32, #tpu.memory_space<vmem>>, vector<256x128xf32>,
      %c0_16 = arith.constant 0 : index
      %c0_17 = arith.constant 0 : index
      %19 = vector.load %arg9[%c0_16, %c0_17] : memref<256x256xf32, #tpu.memory_space<vmem>>, vector<256x256xf32>
      %c0_18 = arith.constant 0 : index
      %c0_19 = arith.constant 0 : index
      %20 = vector.load %arg6[%c0_18, %c0_19] : memref<256x128xf32, #tpu.memory_space<vmem>>, vector<256x128xf32>
      %cst_20 = arith.constant dense<0.000000e+00> : vector<256x128xf32>
      %21 = tpu.matmul %19, %20, %cst_20 {dimension_numbers = #tpu.dot_dimension_numbers<[1], [0], [0], [1], [0, 0, 1, 1], [], []>} : vector<256x256xf32>, vector<256x128xf32>, vector<256x128xf32> -> vector<256x128xf32>
      %c0_21 = arith.constant 0 : index
      %c0_22 = arith.constant 0 : index
      %22 = vector.load %arg7[%c0_21, %c0_22] : memref<1x128xf32, #tpu.memory_space<vmem>>, vector<1x128xf32>
      %23 = vector.broadcast %22 : vector<1x128xf32> to vector<256x128xf32>
      %24 = arith.addf %21, %23 : vector<256x128xf32>
      %c0_23 = arith.constant 0 : index
      %c0_24 = arith.constant 0 : index
      %25 = vector.load %arg8[%c0_23, %c0_24] : memref<256x128xf32, #tpu.memory_space<vmem>>, vector<256x128xf32>
      tpu.vector_store %arg8[%c0_23, %c0_24], %24 {strides = array<i32>} : memref<256x128xf32, #tpu.memory_space<vmem>>, vector<256x128xf32>,
    } else {
    }
    return
  }
  func.func @transform_0(%arg0: i32, %arg1: i32) -> (i32, i32) {
    %c0_i32 = arith.constant 0 : i32
    return %arg0, %arg1 : i32, i32
  }
  func.func @transform_1(%arg0: i32, %arg1: i32) -> (i32, i32) {
    %c0_i32 = arith.constant 0 : i32
    %c0_i32_0 = arith.constant 0 : i32
    return %arg0, %c0_i32 : i32, i32
  }
  func.func @transform_2(%arg0: i32, %arg1: i32) -> (i32, i32) {
    %c0_i32 = arith.constant 0 : i32
    %c0_i32_0 = arith.constant 0 : i32
    return %arg1, %c0_i32 : i32, i32
  }
  func.func @transform_3(%arg0: i32, %arg1: i32) -> (i32, i32) {
    %c0_i32 = arith.constant 0 : i32
    %c0_i32_0 = arith.constant 0 : i32
    return %arg0, %c0_i32 : i32, i32
  }
  func.func @transform_4(%arg0: i32, %arg1: i32) -> (i32, i32) {
    %c0_i32 = arith.constant 0 : i32
    %c0_i32_0 = arith.constant 0 : i32
    %c0_i32_1 = arith.constant 0 : i32
    return %c0_i32, %c0_i32_0 : i32, i32
  }
  func.func @transform_5(%arg0: i32, %arg1: i32) -> (i32, i32) {
    %c0_i32 = arith.constant 0 : i32
    %c0_i32_0 = arith.constant 0 : i32
    %c0_i32_1 = arith.constant 0 : i32
    return %c0_i32, %c0_i32_0 : i32, i32
  }
  func.func @transform_6(%arg0: i32, %arg1: i32) -> (i32, i32) {
    %c0_i32 = arith.constant 0 : i32
    %c0_i32_0 = arith.constant 0 : i32
    return %arg0, %c0_i32 : i32, i32
  }
}

</mosaic_0001>

<llo_original>
// kernel: tpu_custom_call.1
$region0: #{tpu_custom_call.1}
  #allocation0 [shape = 'u32[]', space=smem, size = 0x4, offset = 0x4, fixed_abs, tag = 'smem constant byte address 0x4 - core index']
  #allocation1 [shape = 'u32[72,128]{1,0:T(1,128)}', space=vmem, size = 0x9000, scoped, tag = 'internal scratch']
  #allocation2 [shape = 'f32[256,256]{1,0:T(8,128)}', space=vmem, size = 0x40000, scoped, tag = 'scratch operand']
  %s0 = inlined_call_operand.vmem [shape: s8[512,512], index: 0, kind: input, shape index: {}]
  %s1 = inlined_call_operand.vmem [shape: f32[512,1], index: 1, kind: input, shape index: {}]
  %s2 = inlined_call_operand.hbm [shape: bf16[512,128], index: 2, kind: input, shape index: {}]
  %s3 = inlined_call_operand.hbm [shape: f32[512,128], index: 3, kind: input, shape index: {}]
  %s4 = inlined_call_operand.hbm [shape: f32[256,128], index: 4, kind: input, shape index: {}]
  %s5 = inlined_call_operand.vmem [shape: f32[1,128], index: 5, kind: input, shape index: {}]
  %s6 = inlined_call_operand.hbm [shape: f32[512,128], index: 6, kind: output, shape index: {}]
  %s7 = sld [smem:[#allocation0]]
  $region77: #{tpu_custom_call.1} parent=0
    _
  %s9 = ssub.s32 1, %s7
  %s10 = scalar_select 0, %s9, %s7
  $region1: #{tpu_custom_call.1} parent=0
    #allocation3 [shape = 'u8[131072]{0}', space=vmem, size = 0x20000, scoped, tag = 'input window, operand 2, single buffered']
    #allocation4 [shape = 's32[2]{0}', space=sflag, size = 0x8, scoped, tag = 'scoped memory for tpu_custom_call.1']
    #allocation5 [shape = 's32[2]{0}', space=sflag, size = 0x8, scoped, tag = 'scoped memory for tpu_custom_call.1']
    #allocation6 [shape = 'u8[262144]{0}', space=vmem, size = 0x40000, scoped, tag = 'input window, operand 3']
    #allocation7 [shape = 's32[2]{0}', space=sflag, size = 0x8, scoped, tag = 'scoped memory for tpu_custom_call.1']
    #allocation8 [shape = 'u8[131072]{0}', space=vmem, size = 0x20000, scoped, tag = 'input window, operand 4, single buffered']
    #allocation9 [shape = 'u8[262144]{0}', space=vmem, size = 0x40000, scoped, tag = 'output window, operand 0']
    %11 = vsyncpa [#allocation4], 0
    %12 = vsyncpa [#allocation7], 0
    %s13 = scalar_lea.sflag [#allocation7], 1
    %14 = vsyncpa %s13, 0
    %15 = vsyncpa [#allocation5], 0
    %s16 = scalar_lea.sflag [#allocation5], 1
    %17 = vsyncpa %s16, 0
    loop: start=0, step=1, limit=4
    $region2: #{tpu_custom_call.1} parent=1 // loop_pre_header
      _
    $region3: #{tpu_custom_call.1} parent=1 // loop_header
      %s19 = sphi 0, %s23
      %p20 = scmp.ge.s32.totalorder %s19, 4
      %s26 = sphi 0, %s38
      %s27 = sphi 0, %s34
      %s28 = sphi 0, %s26
      %s29 = sphi 0, %s27
      %s30 = sphi 0, %s28
      %s31 = sphi 0, %s29
      %s43 = sphi 0, %s45
      %s46 = sphi 0, %s43
      %s47 = sphi 0, %s46
      %s63 = sphi 0, %s47
      %s69 = sphi 0, %s71
      %s72 = sphi 0, %s69
      %s73 = sphi 0, %s72
      %s89 = sphi 0, %s73
      %s95 = sphi 0, %s97
      %s98 = sphi 0, %s95
      %s99 = sphi 0, %s98
      %s115 = sphi 0, %s99
      %s121 = sphi 0, %s123
      %s124 = sphi 0, %s121
      %s125 = sphi 0, %s124
      %s141 = sphi 0, %s125
      %s145 = sphi 0, %s145
      %s147 = sphi 0, %s145
      %s148 = sphi 0, %s147
      %s162 = sphi 0, %s148
      %s166 = sphi 0, %s166
      %s168 = sphi 0, %s166
      %s169 = sphi 0, %s168
      %s183 = sphi 0, %s169
      %s189 = sphi 0, %s191
      %s192 = sphi 0, %s189
      %s193 = sphi 0, %s192
      %s209 = sphi 0, %s193
    $region4: #{tpu_custom_call.1} parent=1 // loop_header_branch
      %22 = sbr.rel (%p20) target = $region8
    $region5: #{tpu_custom_call.1} parent=1 // loop_body
      %s24 = ssub.s32 %s19, 1
      %s25 = ssub.s32 %s19, 2
      %s32 = sadd.s32 1, %s27
      %p33 = scmp.ge.s32.totalorder %s32, 1
      %s34 = scalar_select %p33, 0, %s32
      %s35 = sadd.s32 1, %s26
      %s36 = scalar_select %p33, %s35, %s26
      %p37 = scmp.ge.s32.totalorder %s36, 2
      %s38 = scalar_select %p37, 0, %s36
      %s39 = ssub.s32 %s26, %s38
      %s40 = ssub.s32 %s27, %s34
      %s41 = sor.u32 %s39, %s40
      %p42 = scmp.eq.s32.totalorder %s41, 0
      %s44 = sadd.s32 %s43, 1
      %s45 = scalar_select %p42, %s43, %s44
      %p48 = pneg %p42
      %p49 = scmp.eq.s32.totalorder %s19, 1
      %p50 = por %p48, %p49
      %p51 = scmp.ne.s32.totalorder %s43, %s46
      %p52 = scmp.eq.s32.totalorder %s19, 0
      %p53 = por %p51, %p52
      %p54 = scmp.ne.s32.totalorder %s43, %s46
      %p55 = scmp.eq.s32.totalorder %s24, 1
      %p56 = por %p54, %p55
      %p57 = scmp.ne.s32.totalorder %s46, %s47
      %p58 = scmp.eq.s32.totalorder %s24, 0
      %p59 = por %p57, %p58
      %p60 = scmp.ne.s32.totalorder %s46, %s47
      %p61 = scmp.eq.s32.totalorder %s25, 1
      %p62 = por %p60, %p61
      %p64 = scmp.ne.s32.totalorder %s47, %s63
      %p65 = scmp.eq.s32.totalorder %s25, 0
      %p66 = por %p64, %p65
      %s67 = ssub.s32 %s26, %s38
      %p68 = scmp.eq.s32.totalorder %s67, 0
      %s70 = sadd.s32 %s69, 1
      %s71 = scalar_select %p68, %s69, %s70
      %p74 = pneg %p68
      %p75 = scmp.eq.s32.totalorder %s19, 1
      %p76 = por %p74, %p75
      %p77 = scmp.ne.s32.totalorder %s69, %s72
      %p78 = scmp.eq.s32.totalorder %s19, 0
      %p79 = por %p77, %p78
      %p80 = scmp.ne.s32.totalorder %s69, %s72
      %p81 = scmp.eq.s32.totalorder %s24, 1
      %p82 = por %p80, %p81
      %p83 = scmp.ne.s32.totalorder %s72, %s73
      %p84 = scmp.eq.s32.totalorder %s24, 0
      %p85 = por %p83, %p84
      %p86 = scmp.ne.s32.totalorder %s72, %s73
      %p87 = scmp.eq.s32.totalorder %s25, 1
      %p88 = por %p86, %p87
      %p90 = scmp.ne.s32.totalorder %s73, %s89
      %p91 = scmp.eq.s32.totalorder %s25, 0
      %p92 = por %p90, %p91
      %s93 = ssub.s32 %s27, %s34
      %p94 = scmp.eq.s32.totalorder %s93, 0
      %s96 = sadd.s32 %s95, 1
      %s97 = scalar_select %p94, %s95, %s96
      %p100 = pneg %p94
      %p101 = scmp.eq.s32.totalorder %s19, 1
      %p102 = por %p100, %p101
      %p103 = scmp.ne.s32.totalorder %s95, %s98
      %p104 = scmp.eq.s32.totalorder %s19, 0
      %p105 = por %p103, %p104
      %p106 = scmp.ne.s32.totalorder %s95, %s98
      %p107 = scmp.eq.s32.totalorder %s24, 1
      %p108 = por %p106, %p107
      %p109 = scmp.ne.s32.totalorder %s98, %s99
      %p110 = scmp.eq.s32.totalorder %s24, 0
      %p111 = por %p109, %p110
      %p112 = scmp.ne.s32.totalorder %s98, %s99
      %p113 = scmp.eq.s32.totalorder %s25, 1
      %p114 = por %p112, %p113
      %p116 = scmp.ne.s32.totalorder %s99, %s115
      %p117 = scmp.eq.s32.totalorder %s25, 0
      %p118 = por %p116, %p117
      %s119 = ssub.s32 %s26, %s38
      %p120 = scmp.eq.s32.totalorder %s119, 0
      %s122 = sadd.s32 %s121, 1
      %s123 = scalar_select %p120, %s121, %s122
      %p126 = pneg %p120
      %p127 = scmp.eq.s32.totalorder %s19, 1
      %p128 = por %p126, %p127
      %p129 = scmp.ne.s32.totalorder %s121, %s124
      %p130 = scmp.eq.s32.totalorder %s19, 0
      %p131 = por %p129, %p130
      %p132 = scmp.ne.s32.totalorder %s121, %s124
      %p133 = scmp.eq.s32.totalorder %s24, 1
      %p134 = por %p132, %p133
      %p135 = scmp.ne.s32.totalorder %s124, %s125
      %p136 = scmp.eq.s32.totalorder %s24, 0
      %p137 = por %p135, %p136
      %p138 = scmp.ne.s32.totalorder %s124, %s125
      %p139 = scmp.eq.s32.totalorder %s25, 1
      %p140 = por %p138, %p139
      %p142 = scmp.ne.s32.totalorder %s125, %s141
      %p143 = scmp.eq.s32.totalorder %s25, 0
      %p144 = por %p142, %p143
      %s146 = sadd.s32 %s145, 1
      %p149 = scmp.eq.s32.totalorder %s19, 1
      %p150 = scmp.ne.s32.totalorder %s145, %s147
      %p151 = scmp.eq.s32.totalorder %s19, 0
      %p152 = por %p150, %p151
      %p153 = scmp.ne.s32.totalorder %s145, %s147
      %p154 = scmp.eq.s32.totalorder %s24, 1
      %p155 = por %p153, %p154
      %p156 = scmp.ne.s32.totalorder %s147, %s148
      %p157 = scmp.eq.s32.totalorder %s24, 0
      %p158 = por %p156, %p157
      %p159 = scmp.ne.s32.totalorder %s147, %s148
      %p160 = scmp.eq.s32.totalorder %s25, 1
      %p161 = por %p159, %p160
      %p163 = scmp.ne.s32.totalorder %s148, %s162
      %p164 = scmp.eq.s32.totalorder %s25, 0
      %p165 = por %p163, %p164
      %s167 = sadd.s32 %s166, 1
      %p170 = scmp.eq.s32.totalorder %s19, 1
      %p171 = scmp.ne.s32.totalorder %s166, %s168
      %p172 = scmp.eq.s32.totalorder %s19, 0
      %p173 = por %p171, %p172
      %p174 = scmp.ne.s32.totalorder %s166, %s168
      %p175 = scmp.eq.s32.totalorder %s24, 1
      %p176 = por %p174, %p175
      %p177 = scmp.ne.s32.totalorder %s168, %s169
      %p178 = scmp.eq.s32.totalorder %s24, 0
      %p179 = por %p177, %p178
      %p180 = scmp.ne.s32.totalorder %s168, %s169
      %p181 = scmp.eq.s32.totalorder %s25, 1
      %p182 = por %p180, %p181
      %p184 = scmp.ne.s32.totalorder %s169, %s183
      %p185 = scmp.eq.s32.totalorder %s25, 0
      %p186 = por %p184, %p185
      %s187 = ssub.s32 %s26, %s38
      %p188 = scmp.eq.s32.totalorder %s187, 0
      %s190 = sadd.s32 %s189, 1
      %s191 = scalar_select %p188, %s189, %s190
      %p194 = pneg %p188
      %p195 = scmp.eq.s32.totalorder %s19, 1
      %p196 = por %p194, %p195
      %p197 = scmp.ne.s32.totalorder %s189, %s192
      %p198 = scmp.eq.s32.totalorder %s19, 0
      %p199 = por %p197, %p198
      %p200 = scmp.ne.s32.totalorder %s189, %s192
      %p201 = scmp.eq.s32.totalorder %s24, 1
      %p202 = por %p200, %p201
      %p203 = scmp.ne.s32.totalorder %s192, %s193
      %p204 = scmp.eq.s32.totalorder %s24, 0
      %p205 = por %p203, %p204
      %p206 = scmp.ne.s32.totalorder %s192, %s193
      %p207 = scmp.eq.s32.totalorder %s25, 1
      %p208 = por %p206, %p207
      %p210 = scmp.ne.s32.totalorder %s193, %s209
      %p211 = scmp.eq.s32.totalorder %s25, 0
      %p212 = por %p210, %p211
      %p213 = scmp.le.s32.totalorder 1, %s19
      %p214 = scmp.lt.s32.totalorder %s19, 3
      %p215 = pnand %p213, %p214
      %p216 = pneg %p215
      // Predicated region
      $region9: #{tpu_custom_call.1} parent=5 // pred_check
        _
      $region10: #{tpu_custom_call.1} parent=5 // pred_check_branch
        %218 = sbr.rel (%p215) target = $region12
      $region11: #{tpu_custom_call.1} parent=5 // pred_region
        %s219 = ssub.s32 %s19, 1
        // Predicated region
        $region13: #{tpu_custom_call.1} parent=11 // pred_check
          %p220 = pneg %p111
        $region14: #{tpu_custom_call.1} parent=11 // pred_check_branch
          %222 = sbr.rel (%p220) target = $region16
        $region15: #{tpu_custom_call.1} parent=11 // pred_region
          %s223 = smul.u32 64, %s29
          %225 = vsyncadd [#allocation4], 0
          %s226 = smul.addr %s223, 4
          %s227 = scalar_lea.hbm %s2, %s226
          %s228 = sshll.u32 %s227, 4
          %s229 = int_to_ptr.hbm [resolvable:$true] %s228
          %s230 = sshll.u32 [#allocation3], 4
          %s231 = int_to_ptr.vmem [resolvable:$true] %s230
          %236 = dma.hbm_to_vmem [thread:$0]  %s229, 4096, %s231, [#allocation4], 64, 64, 4
        $region16: #{tpu_custom_call.1} parent=11 // pred_fallthru
          _
        // Predicated region
        $region17: #{tpu_custom_call.1} parent=11 // pred_check
          %p237 = pneg %p158
        $region18: #{tpu_custom_call.1} parent=11 // pred_check_branch
          %239 = sbr.rel (%p237) target = $region20
        $region19: #{tpu_custom_call.1} parent=11 // pred_region
          %241 = vsyncadd [#allocation7], 0
          %s242 = sshll.u32 %s4, 4
          %s243 = int_to_ptr.hbm [resolvable:$true] %s242
          %s244 = sshll.u32 [#allocation8], 4
          %s245 = int_to_ptr.vmem [resolvable:$true] %s244
          %250 = dma.hbm_to_vmem [thread:$0]  %s243, 4096, %s245, [#allocation7], 128, 128, 8
        $region20: #{tpu_custom_call.1} parent=11 // pred_fallthru
          _
        // Predicated region
        $region21: #{tpu_custom_call.1} parent=11 // pred_check
          %p251 = pneg %p179
        $region22: #{tpu_custom_call.1} parent=11 // pred_check_branch
          %253 = sbr.rel (%p251) target = $region24
        $region23: #{tpu_custom_call.1} parent=11 // pred_region
          _
        $region24: #{tpu_custom_call.1} parent=11 // pred_fallthru
          _
      $region12: #{tpu_custom_call.1} parent=5 // pred_fallthru
        _
      %p254 = scmp.lt.s32.totalorder %s19, 2
      // Predicated region
      $region25: #{tpu_custom_call.1} parent=5 // pred_check
        %p255 = pneg %p254
      $region26: #{tpu_custom_call.1} parent=5 // pred_check_branch
        %257 = sbr.rel (%p255) target = $region28
      $region27: #{tpu_custom_call.1} parent=5 // pred_region
        // Predicated region
        $region29: #{tpu_custom_call.1} parent=27 // pred_check
          %p258 = pneg %p53
        $region30: #{tpu_custom_call.1} parent=27 // pred_check_branch
          %260 = sbr.rel (%p258) target = $region32
        $region31: #{tpu_custom_call.1} parent=27 // pred_region
          %s261 = smul.u32 8, %s26
          %s262 = smul.u32 4, %s27
          %p263 = scmp.lt.s32.totalorder %s261, 15
          %s264 = scalar_select %p263, %s261, 15
          %p265 = scmp.lt.s32.totalorder %s262, 3
          %s266 = scalar_select %p265, %s262, 3
          %s267 = smul.addr %s264, 4
          %s268 = sadd.s32 %s266, %s267
          %s269 = smul.addr %s268, 8
          %s270 = scalar_lea.vmem %s0, %s269
          %s271 = smul.u32 8, %s26
          %s272 = smul.u32 4, %s27
        $region32: #{tpu_custom_call.1} parent=27 // pred_fallthru
          _
        // Predicated region
        $region33: #{tpu_custom_call.1} parent=27 // pred_check
          %p273 = pneg %p79
        $region34: #{tpu_custom_call.1} parent=27 // pred_check_branch
          %275 = sbr.rel (%p273) target = $region36
        $region35: #{tpu_custom_call.1} parent=27 // pred_region
          %s276 = smul.u32 32, %s26
          %p277 = scmp.lt.s32.totalorder %s276, 63
          %s278 = scalar_select %p277, %s276, 63
          %s279 = smul.addr %s278, 8
          %s280 = scalar_lea.vmem %s1, %s279
          %s281 = smul.u32 32, %s26
        $region36: #{tpu_custom_call.1} parent=27 // pred_fallthru
          _
        // Predicated region
        $region37: #{tpu_custom_call.1} parent=27 // pred_check
          %p282 = pneg %p131
        $region38: #{tpu_custom_call.1} parent=27 // pred_check_branch
          %284 = sbr.rel (%p282) target = $region40
        $region39: #{tpu_custom_call.1} parent=27 // pred_region
          %s285 = sand.u32 %s19, 1
          %s286 = scalar_lea.sflag [#allocation7], %s285
          %s287 = sand.u32 %s121, 1
          %s288 = smul.addr %s287, 256
          %s289 = scalar_lea.vmem [#allocation6], %s288
          %s290 = smul.u32 32, %s26
          %292 = vsyncadd %s286, 0
          %s293 = smul.addr %s290, 8
          %s294 = scalar_lea.hbm %s3, %s293
          %s295 = sshll.u32 %s294, 4
          %s296 = int_to_ptr.hbm [resolvable:$true] %s295
          %s297 = sshll.u32 %s289, 4
          %s298 = int_to_ptr.vmem [resolvable:$true] %s297
          %303 = dma.hbm_to_vmem [thread:$0]  %s296, 4096, %s298, %s286, 128, 128, 8
        $region40: #{tpu_custom_call.1} parent=27 // pred_fallthru
          _
      $region28: #{tpu_custom_call.1} parent=5 // pred_fallthru
        _
      %p304 = scmp.le.s32.totalorder 1, %s19
      %p305 = scmp.lt.s32.totalorder %s19, 3
      %p306 = pnand %p304, %p305
      %p307 = pneg %p306
      // Predicated region
      $region41: #{tpu_custom_call.1} parent=5 // pred_check
        _
      $region42: #{tpu_custom_call.1} parent=5 // pred_check_branch
        %309 = sbr.rel (%p306) target = $region44
      $region43: #{tpu_custom_call.1} parent=5 // pred_region
        %s310 = ssub.s32 %s19, 1
        // Predicated region
        $region45: #{tpu_custom_call.1} parent=43 // pred_check
          %p311 = pneg %p111
        $region46: #{tpu_custom_call.1} parent=43 // pred_check_branch
          %313 = sbr.rel (%p311) target = $region48
        $region47: #{tpu_custom_call.1} parent=43 // pred_region
          %315 = dma.done [#allocation4], 4096
        $region48: #{tpu_custom_call.1} parent=43 // pred_fallthru
          _
        %s316 = sand.u32 %s24, 1
        %s317 = scalar_lea.sflag [#allocation7], %s316
        %s318 = sand.u32 %s124, 1
        %s319 = smul.addr %s318, 256
        %s320 = scalar_lea.vmem [#allocation6], %s319
        // Predicated region
        $region49: #{tpu_custom_call.1} parent=43 // pred_check
          %p321 = pneg %p137
        $region50: #{tpu_custom_call.1} parent=43 // pred_check_branch
          %323 = sbr.rel (%p321) target = $region52
        $region51: #{tpu_custom_call.1} parent=43 // pred_region
          %325 = dma.done %s317, 4096
        $region52: #{tpu_custom_call.1} parent=43 // pred_fallthru
          _
        // Predicated region
        $region53: #{tpu_custom_call.1} parent=43 // pred_check
          %p326 = pneg %p158
        $region54: #{tpu_custom_call.1} parent=43 // pred_check_branch
          %328 = sbr.rel (%p326) target = $region56
        $region55: #{tpu_custom_call.1} parent=43 // pred_region
          %330 = dma.done [#allocation7], 4096
        $region56: #{tpu_custom_call.1} parent=43 // pred_fallthru
          _
        %s331 = smul.u32 8, %s28
        %s332 = smul.u32 4, %s29
        %p333 = scmp.lt.s32.totalorder %s331, 15
        %s334 = scalar_select %p333, %s331, 15
        %p335 = scmp.lt.s32.totalorder %s332, 3
        %s336 = scalar_select %p335, %s332, 3
        %s337 = smul.addr %s334, 4
        %s338 = sadd.s32 %s336, %s337
        %s339 = smul.addr %s338, 8
        %s340 = scalar_lea.vmem %s0, %s339
        %p341 = pneg %p59
        %p342 = pneg %p56
        %s343 = smul.u32 32, %s28
        %p344 = scmp.lt.s32.totalorder %s343, 63
        %s345 = scalar_select %p344, %s343, 63
        %s346 = smul.addr %s345, 8
        %s347 = scalar_lea.vmem %s1, %s346
        %p348 = pneg %p85
        %p349 = pneg %p82
        %p350 = pneg %p111
        %p351 = pneg %p108
        %s352 = sand.u32 %s24, 1
        %s353 = scalar_lea.sflag [#allocation7], %s352
        %s354 = sand.u32 %s124, 1
        %s355 = smul.addr %s354, 256
        %s356 = scalar_lea.vmem [#allocation6], %s355
        %p357 = pneg %p137
        %p358 = pneg %p134
        %p359 = pneg %p158
        %p360 = pneg %p155
        %p361 = pneg %p179
        %p362 = pneg %p176
        %p363 = pneg %p205
        %p364 = pneg %p202
        %s365 = sand.u32 %s192, 1
        %s366 = scalar_lea.sflag [#allocation5], %s365
        %s367 = sand.u32 %s192, 1
        %s368 = smul.addr %s367, 256
        %s369 = scalar_lea.vmem [#allocation9], %s368
        %s370 = smul.u32 8, %s28
        %s371 = smul.u32 4, %s29
        %p372 = scmp.lt.s32.totalorder %s370, 15
        %s373 = scalar_select %p372, %s370, 15
        %p374 = scmp.lt.s32.totalorder %s371, 3
        %s375 = scalar_select %p374, %s371, 3
        %s376 = smul.addr %s373, 4
        %s377 = sadd.s32 %s375, %s376
        %s378 = smul.addr %s377, 8
        %s379 = scalar_lea.vmem %s0, %s378
        %s380 = smul.u32 8, %s28
        %s381 = smul.u32 4, %s29
        %s382 = smul.u32 32, %s28
        %p383 = scmp.lt.s32.totalorder %s382, 63
        %s384 = scalar_select %p383, %s382, 63
        %s385 = smul.addr %s384, 8
        %s386 = scalar_lea.vmem %s1, %s385
        %s387 = smul.u32 32, %s28
        %s388 = smul.u32 64, %s29
        %s389 = smul.u32 32, %s28
        %s390 = smul.u32 32, %s28
        %p391 = scmp.eq.s32.totalorder %s29, 0
        // Predicated region
        $region57: #{tpu_custom_call.1} parent=43 // pred_check
          %p392 = pneg %p391
        $region58: #{tpu_custom_call.1} parent=43 // pred_check_branch
          %394 = sbr.rel (%p392) target = $region60
        $region59: #{tpu_custom_call.1} parent=43 // pred_region
          %395 = vst [vmem:[#allocation2] sm:$0xff] 0.0
          %396 = vst [vmem:[#allocation2 + $0x10] sm:$0xff] 0.0
          %397 = vst [vmem:[#allocation2 + $0x20] sm:$0xff] 0.0
          %398 = vst [vmem:[#allocation2 + $0x30] sm:$0xff] 0.0
          %399 = vst [vmem:[#allocation2 + $0x40] sm:$0xff] 0.0
          %400 = vst [vmem:[#allocation2 + $0x50] sm:$0xff] 0.0
          %401 = vst [vmem:[#allocation2 + $0x60] sm:$0xff] 0.0
          %402 = vst [vmem:[#allocation2 + $0x70] sm:$0xff] 0.0
          %403 = vst [vmem:[#allocation2 + $0x80] sm:$0xff] 0.0
          %404 = vst [vmem:[#allocation2 + $0x90] sm:$0xff] 0.0
          %405 = vst [vmem:[#allocation2 + $0xa0] sm:$0xff] 0.0
          %406 = vst [vmem:[#allocation2 + $0xb0] sm:$0xff] 0.0
          %407 = vst [vmem:[#allocation2 + $0xc0] sm:$0xff] 0.0
          %408 = vst [vmem:[#allocation2 + $0xd0] sm:$0xff] 0.0
          %409 = vst [vmem:[#allocation2 + $0xe0] sm:$0xff] 0.0
          %410 = vst [vmem:[#allocation2 + $0xf0] sm:$0xff] 0.0
          %411 = vst [vmem:[#allocation2 + $0x100] sm:$0xff] 0.0
          %412 = vst [vmem:[#allocation2 + $0x110] sm:$0xff] 0.0
          %413 = vst [vmem:[#allocation2 + $0x120] sm:$0xff] 0.0
          %414 = vst [vmem:[#allocation2 + $0x130] sm:$0xff] 0.0
          %415 = vst [vmem:[#allocation2 + $0x140] sm:$0xff] 0.0
          %416 = vst [vmem:[#allocation2 + $0x150] sm:$0xff] 0.0
          %417 = vst [vmem:[#allocation2 + $0x160] sm:$0xff] 0.0
          %418 = vst [vmem:[#allocation2 + $0x170] sm:$0xff] 0.0
          %419 = vst [vmem:[#allocation2 + $0x180] sm:$0xff] 0.0
          %420 = vst [vmem:[#allocation2 + $0x190] sm:$0xff] 0.0
          %421 = vst [vmem:[#allocation2 + $0x1a0] sm:$0xff] 0.0
          %422 = vst [vmem:[#allocation2 + $0x1b0] sm:$0xff] 0.0
          %423 = vst [vmem:[#allocation2 + $0x1c0] sm:$0xff] 0.0
          %424 = vst [vmem:[#allocation2 + $0x1d0] sm:$0xff] 0.0
          %425 = vst [vmem:[#allocation2 + $0x1e0] sm:$0xff] 0.0
          %426 = vst [vmem:[#allocation2 + $0x1f0] sm:$0xff] 0.0
          %v427 = vld [vmem:[%s320] sm:$0xff]
          %v428 = vld [vmem:[%s320 + $0x8] sm:$0xff]
          %v429 = vld [vmem:[%s320 + $0x10] sm:$0xff]
          %v430 = vld [vmem:[%s320 + $0x18] sm:$0xff]
          %v431 = vld [vmem:[%s320 + $0x20] sm:$0xff]
          %v432 = vld [vmem:[%s320 + $0x28] sm:$0xff]
          %v433 = vld [vmem:[%s320 + $0x30] sm:$0xff]
          %v434 = vld [vmem:[%s320 + $0x38] sm:$0xff]
          %v435 = vld [vmem:[%s320 + $0x40] sm:$0xff]
          %v436 = vld [vmem:[%s320 + $0x48] sm:$0xff]
          %v437 = vld [vmem:[%s320 + $0x50] sm:$0xff]
          %v438 = vld [vmem:[%s320 + $0x58] sm:$0xff]
          %v439 = vld [vmem:[%s320 + $0x60] sm:$0xff]
          %v440 = vld [vmem:[%s320 + $0x68] sm:$0xff]
          %v441 = vld [vmem:[%s320 + $0x70] sm:$0xff]
          %v442 = vld [vmem:[%s320 + $0x78] sm:$0xff]
          %v443 = vld [vmem:[%s320 + $0x80] sm:$0xff]
          %v444 = vld [vmem:[%s320 + $0x88] sm:$0xff]
          %v445 = vld [vmem:[%s320 + $0x90] sm:$0xff]
          %v446 = vld [vmem:[%s320 + $0x98] sm:$0xff]
          %v447 = vld [vmem:[%s320 + $0xa0] sm:$0xff]
          %v448 = vld [vmem:[%s320 + $0xa8] sm:$0xff]
          %v449 = vld [vmem:[%s320 + $0xb0] sm:$0xff]
          %v450 = vld [vmem:[%s320 + $0xb8] sm:$0xff]
          %v451 = vld [vmem:[%s320 + $0xc0] sm:$0xff]
          %v452 = vld [vmem:[%s320 + $0xc8] sm:$0xff]
          %v453 = vld [vmem:[%s320 + $0xd0] sm:$0xff]
          %v454 = vld [vmem:[%s320 + $0xd8] sm:$0xff]
          %v455 = vld [vmem:[%s320 + $0xe0] sm:$0xff]
          %v456 = vld [vmem:[%s320 + $0xe8] sm:$0xff]
          %v457 = vld [vmem:[%s320 + $0xf0] sm:$0xff]
          %v458 = vld [vmem:[%s320 + $0xf8] sm:$0xff]
          %459 = vst [vmem:[#allocation2 + $0x8] sm:$0xff] %v427
          %460 = vst [vmem:[#allocation2 + $0x18] sm:$0xff] %v428
          %461 = vst [vmem:[#allocation2 + $0x28] sm:$0xff] %v429
          %462 = vst [vmem:[#allocation2 + $0x38] sm:$0xff] %v430
          %463 = vst [vmem:[#allocation2 + $0x48] sm:$0xff] %v431
          %464 = vst [vmem:[#allocation2 + $0x58] sm:$0xff] %v432
          %465 = vst [vmem:[#allocation2 + $0x68] sm:$0xff] %v433
          %466 = vst [vmem:[#allocation2 + $0x78] sm:$0xff] %v434
          %467 = vst [vmem:[#allocation2 + $0x88] sm:$0xff] %v435
          %468 = vst [vmem:[#allocation2 + $0x98] sm:$0xff] %v436
          %469 = vst [vmem:[#allocation2 + $0xa8] sm:$0xff] %v437
          %470 = vst [vmem:[#allocation2 + $0xb8] sm:$0xff] %v438
          %471 = vst [vmem:[#allocation2 + $0xc8] sm:$0xff] %v439
          %472 = vst [vmem:[#allocation2 + $0xd8] sm:$0xff] %v440
          %473 = vst [vmem:[#allocation2 + $0xe8] sm:$0xff] %v441
          %474 = vst [vmem:[#allocation2 + $0xf8] sm:$0xff] %v442
          %475 = vst [vmem:[#allocation2 + $0x108] sm:$0xff] %v443
          %476 = vst [vmem:[#allocation2 + $0x118] sm:$0xff] %v444
          %477 = vst [vmem:[#allocation2 + $0x128] sm:$0xff] %v445
          %478 = vst [vmem:[#allocation2 + $0x138] sm:$0xff] %v446
          %479 = vst [vmem:[#allocation2 + $0x148] sm:$0xff] %v447
          %480 = vst [vmem:[#allocation2 + $0x158] sm:$0xff] %v448
          %481 = vst [vmem:[#allocation2 + $0x168] sm:$0xff] %v449
          %482 = vst [vmem:[#allocation2 + $0x178] sm:$0xff] %v450
          %483 = vst [vmem:[#allocation2 + $0x188] sm:$0xff] %v451
          %484 = vst [vmem:[#allocation2 + $0x198] sm:$0xff] %v452
          %485 = vst [vmem:[#allocation2 + $0x1a8] sm:$0xff] %v453
          %486 = vst [vmem:[#allocation2 + $0x1b8] sm:$0xff] %v454
          %487 = vst [vmem:[#allocation2 + $0x1c8] sm:$0xff] %v455
          %488 = vst [vmem:[#allocation2 + $0x1d8] sm:$0xff] %v456
          %489 = vst [vmem:[#allocation2 + $0x1e8] sm:$0xff] %v457
          %490 = vst [vmem:[#allocation2 + $0x1f8] sm:$0xff] %v458
        $region60: #{tpu_custom_call.1} parent=43 // pred_fallthru
          _
        %v491 = vld [vmem:[%s379] sm:$0xff]
        %v492 = vld [vmem:[%s379 + $0x8] sm:$0xff]
        %v493 = vld [vmem:[%s379 + $0x10] sm:$0xff]
        %v494 = vld [vmem:[%s379 + $0x18] sm:$0xff]
        %v495 = vld [vmem:[%s379 + $0x20] sm:$0xff]
        %v496 = vld [vmem:[%s379 + $0x28] sm:$0xff]
        %v497 = vld [vmem:[%s379 + $0x30] sm:$0xff]
        %v498 = vld [vmem:[%s379 + $0x38] sm:$0xff]
        %v499 = vld [vmem:[%s379 + $0x40] sm:$0xff]
        %v500 = vld [vmem:[%s379 + $0x48] sm:$0xff]
        %v501 = vld [vmem:[%s379 + $0x50] sm:$0xff]
        %v502 = vld [vmem:[%s379 + $0x58] sm:$0xff]
        %v503 = vld [vmem:[%s379 + $0x60] sm:$0xff]
        %v504 = vld [vmem:[%s379 + $0x68] sm:$0xff]
        %v505 = vld [vmem:[%s379 + $0x70] sm:$0xff]
        %v506 = vld [vmem:[%s379 + $0x78] sm:$0xff]
        %v507 = vld [vmem:[%s379 + $0x80] sm:$0xff]
        %v508 = vld [vmem:[%s379 + $0x88] sm:$0xff]
        %v509 = vld [vmem:[%s379 + $0x90] sm:$0xff]
        %v510 = vld [vmem:[%s379 + $0x98] sm:$0xff]
        %v511 = vld [vmem:[%s379 + $0xa0] sm:$0xff]
        %v512 = vld [vmem:[%s379 + $0xa8] sm:$0xff]
        %v513 = vld [vmem:[%s379 + $0xb0] sm:$0xff]
        %v514 = vld [vmem:[%s379 + $0xb8] sm:$0xff]
        %v515 = vld [vmem:[%s379 + $0xc0] sm:$0xff]
        %v516 = vld [vmem:[%s379 + $0xc8] sm:$0xff]
        %v517 = vld [vmem:[%s379 + $0xd0] sm:$0xff]
        %v518 = vld [vmem:[%s379 + $0xd8] sm:$0xff]
        %v519 = vld [vmem:[%s379 + $0xe0] sm:$0xff]
        %v520 = vld [vmem:[%s379 + $0xe8] sm:$0xff]
        %v521 = vld [vmem:[%s379 + $0xf0] sm:$0xff]
        %v522 = vld [vmem:[%s379 + $0xf8] sm:$0xff]
        %v523 = vunpack.c.0.s8 %v491
        %v524 = vunpack.c.0.s8 %v492
        %v525 = vunpack.c.0.s8 %v493
        %v526 = vunpack.c.0.s8 %v494
        %v527 = vunpack.c.1.s8 %v491
        %v528 = vunpack.c.1.s8 %v492
        %v529 = vunpack.c.1.s8 %v493
        %v530 = vunpack.c.1.s8 %v494
        %v531 = vunpack.c.2.s8 %v491
        %v532 = vunpack.c.2.s8 %v492
        %v533 = vunpack.c.2.s8 %v493
        %v534 = vunpack.c.2.s8 %v494
        %v535 = vunpack.c.3.s8 %v491
        %v536 = vunpack.c.3.s8 %v492
        %v537 = vunpack.c.3.s8 %v493
        %v538 = vunpack.c.3.s8 %v494
        %v539 = vunpack.c.0.s8 %v495
        %v540 = vunpack.c.0.s8 %v496
        %v541 = vunpack.c.0.s8 %v497
        %v542 = vunpack.c.0.s8 %v498
        %v543 = vunpack.c.1.s8 %v495
        %v544 = vunpack.c.1.s8 %v496
        %v545 = vunpack.c.1.s8 %v497
        %v546 = vunpack.c.1.s8 %v498
        %v547 = vunpack.c.2.s8 %v495
        %v548 = vunpack.c.2.s8 %v496
        %v549 = vunpack.c.2.s8 %v497
        %v550 = vunpack.c.2.s8 %v498
        %v551 = vunpack.c.3.s8 %v495
        %v552 = vunpack.c.3.s8 %v496
        %v553 = vunpack.c.3.s8 %v497
        %v554 = vunpack.c.3.s8 %v498
        %v555 = vunpack.c.0.s8 %v499
        %v556 = vunpack.c.0.s8 %v500
        %v557 = vunpack.c.0.s8 %v501
        %v558 = vunpack.c.0.s8 %v502
        %v559 = vunpack.c.1.s8 %v499
        %v560 = vunpack.c.1.s8 %v500
        %v561 = vunpack.c.1.s8 %v501
        %v562 = vunpack.c.1.s8 %v502
        %v563 = vunpack.c.2.s8 %v499
        %v564 = vunpack.c.2.s8 %v500
        %v565 = vunpack.c.2.s8 %v501
        %v566 = vunpack.c.2.s8 %v502
        %v567 = vunpack.c.3.s8 %v499
        %v568 = vunpack.c.3.s8 %v500
        %v569 = vunpack.c.3.s8 %v501
        %v570 = vunpack.c.3.s8 %v502
        %v571 = vunpack.c.0.s8 %v503
        %v572 = vunpack.c.0.s8 %v504
        %v573 = vunpack.c.0.s8 %v505
        %v574 = vunpack.c.0.s8 %v506
        %v575 = vunpack.c.1.s8 %v503
        %v576 = vunpack.c.1.s8 %v504
        %v577 = vunpack.c.1.s8 %v505
        %v578 = vunpack.c.1.s8 %v506
        %v579 = vunpack.c.2.s8 %v503
        %v580 = vunpack.c.2.s8 %v504
        %v581 = vunpack.c.2.s8 %v505
        %v582 = vunpack.c.2.s8 %v506
        %v583 = vunpack.c.3.s8 %v503
        %v584 = vunpack.c.3.s8 %v504
        %v585 = vunpack.c.3.s8 %v505
        %v586 = vunpack.c.3.s8 %v506
        %v587 = vunpack.c.0.s8 %v507
        %v588 = vunpack.c.0.s8 %v508
        %v589 = vunpack.c.0.s8 %v509
        %v590 = vunpack.c.0.s8 %v510
        %v591 = vunpack.c.1.s8 %v507
        %v592 = vunpack.c.1.s8 %v508
        %v593 = vunpack.c.1.s8 %v509
        %v594 = vunpack.c.1.s8 %v510
        %v595 = vunpack.c.2.s8 %v507
        %v596 = vunpack.c.2.s8 %v508
        %v597 = vunpack.c.2.s8 %v509
        %v598 = vunpack.c.2.s8 %v510
        %v599 = vunpack.c.3.s8 %v507
        %v600 = vunpack.c.3.s8 %v508
        %v601 = vunpack.c.3.s8 %v509
        %v602 = vunpack.c.3.s8 %v510
        %v603 = vunpack.c.0.s8 %v511
        %v604 = vunpack.c.0.s8 %v512
        %v605 = vunpack.c.0.s8 %v513
        %v606 = vunpack.c.0.s8 %v514
        %v607 = vunpack.c.1.s8 %v511
        %v608 = vunpack.c.1.s8 %v512
        %v609 = vunpack.c.1.s8 %v513
        %v610 = vunpack.c.1.s8 %v514
        %v611 = vunpack.c.2.s8 %v511
        %v612 = vunpack.c.2.s8 %v512
        %v613 = vunpack.c.2.s8 %v513
        %v614 = vunpack.c.2.s8 %v514
        %v615 = vunpack.c.3.s8 %v511
        %v616 = vunpack.c.3.s8 %v512
        %v617 = vunpack.c.3.s8 %v513
        %v618 = vunpack.c.3.s8 %v514
        %v619 = vunpack.c.0.s8 %v515
        %v620 = vunpack.c.0.s8 %v516
        %v621 = vunpack.c.0.s8 %v517
        %v622 = vunpack.c.0.s8 %v518
        %v623 = vunpack.c.1.s8 %v515
        %v624 = vunpack.c.1.s8 %v516
        %v625 = vunpack.c.1.s8 %v517
        %v626 = vunpack.c.1.s8 %v518
        %v627 = vunpack.c.2.s8 %v515
        %v628 = vunpack.c.2.s8 %v516
        %v629 = vunpack.c.2.s8 %v517
        %v630 = vunpack.c.2.s8 %v518
        %v631 = vunpack.c.3.s8 %v515
        %v632 = vunpack.c.3.s8 %v516
        %v633 = vunpack.c.3.s8 %v517
        %v634 = vunpack.c.3.s8 %v518
        %v635 = vunpack.c.0.s8 %v519
        %v636 = vunpack.c.0.s8 %v520
        %v637 = vunpack.c.0.s8 %v521
        %v638 = vunpack.c.0.s8 %v522
        %v639 = vunpack.c.1.s8 %v519
        %v640 = vunpack.c.1.s8 %v520
        %v641 = vunpack.c.1.s8 %v521
        %v642 = vunpack.c.1.s8 %v522
        %v643 = vunpack.c.2.s8 %v519
        %v644 = vunpack.c.2.s8 %v520
        %v645 = vunpack.c.2.s8 %v521
        %v646 = vunpack.c.2.s8 %v522
        %v647 = vunpack.c.3.s8 %v519
        %v648 = vunpack.c.3.s8 %v520
        %v649 = vunpack.c.3.s8 %v521
        %v650 = vunpack.c.3.s8 %v522
        %v651 = vcvt.s32.f32 %v523
        %v652 = vcvt.s32.f32 %v524
        %v653 = vcvt.s32.f32 %v525
        %v654 = vcvt.s32.f32 %v526
        %v655 = vcvt.s32.f32 %v527
        %v656 = vcvt.s32.f32 %v528
        %v657 = vcvt.s32.f32 %v529
        %v658 = vcvt.s32.f32 %v530
        %v659 = vcvt.s32.f32 %v531
        %v660 = vcvt.s32.f32 %v532
        %v661 = vcvt.s32.f32 %v533
        %v662 = vcvt.s32.f32 %v534
        %v663 = vcvt.s32.f32 %v535
        %v664 = vcvt.s32.f32 %v536
        %v665 = vcvt.s32.f32 %v537
        %v666 = vcvt.s32.f32 %v538
        %v667 = vcvt.s32.f32 %v539
        %v668 = vcvt.s32.f32 %v540
        %v669 = vcvt.s32.f32 %v541
        %v670 = vcvt.s32.f32 %v542
        %v671 = vcvt.s32.f32 %v543
        %v672 = vcvt.s32.f32 %v544
        %v673 = vcvt.s32.f32 %v545
        %v674 = vcvt.s32.f32 %v546
        %v675 = vcvt.s32.f32 %v547
        %v676 = vcvt.s32.f32 %v548
        %v677 = vcvt.s32.f32 %v549
        %v678 = vcvt.s32.f32 %v550
        %v679 = vcvt.s32.f32 %v551
        %v680 = vcvt.s32.f32 %v552
        %v681 = vcvt.s32.f32 %v553
        %v682 = vcvt.s32.f32 %v554
        %v683 = vcvt.s32.f32 %v555
        %v684 = vcvt.s32.f32 %v556
        %v685 = vcvt.s32.f32 %v557
        %v686 = vcvt.s32.f32 %v558
        %v687 = vcvt.s32.f32 %v559
        %v688 = vcvt.s32.f32 %v560
        %v689 = vcvt.s32.f32 %v561
        %v690 = vcvt.s32.f32 %v562
        %v691 = vcvt.s32.f32 %v563
        %v692 = vcvt.s32.f32 %v564
        %v693 = vcvt.s32.f32 %v565
        %v694 = vcvt.s32.f32 %v566
        %v695 = vcvt.s32.f32 %v567
        %v696 = vcvt.s32.f32 %v568
        %v697 = vcvt.s32.f32 %v569
        %v698 = vcvt.s32.f32 %v570
        %v699 = vcvt.s32.f32 %v571
        %v700 = vcvt.s32.f32 %v572
        %v701 = vcvt.s32.f32 %v573
        %v702 = vcvt.s32.f32 %v574
        %v703 = vcvt.s32.f32 %v575
        %v704 = vcvt.s32.f32 %v576
        %v705 = vcvt.s32.f32 %v577
        %v706 = vcvt.s32.f32 %v578
        %v707 = vcvt.s32.f32 %v579
        %v708 = vcvt.s32.f32 %v580
        %v709 = vcvt.s32.f32 %v581
        %v710 = vcvt.s32.f32 %v582
        %v711 = vcvt.s32.f32 %v583
        %v712 = vcvt.s32.f32 %v584
        %v713 = vcvt.s32.f32 %v585
        %v714 = vcvt.s32.f32 %v586
        %v715 = vcvt.s32.f32 %v587
        %v716 = vcvt.s32.f32 %v588
        %v717 = vcvt.s32.f32 %v589
        %v718 = vcvt.s32.f32 %v590
        %v719 = vcvt.s32.f32 %v591
        %v720 = vcvt.s32.f32 %v592
        %v721 = vcvt.s32.f32 %v593
        %v722 = vcvt.s32.f32 %v594
        %v723 = vcvt.s32.f32 %v595
        %v724 = vcvt.s32.f32 %v596
        %v725 = vcvt.s32.f32 %v597
        %v726 = vcvt.s32.f32 %v598
        %v727 = vcvt.s32.f32 %v599
        %v728 = vcvt.s32.f32 %v600
        %v729 = vcvt.s32.f32 %v601
        %v730 = vcvt.s32.f32 %v602
        %v731 = vcvt.s32.f32 %v603
        %v732 = vcvt.s32.f32 %v604
        %v733 = vcvt.s32.f32 %v605
        %v734 = vcvt.s32.f32 %v606
        %v735 = vcvt.s32.f32 %v607
        %v736 = vcvt.s32.f32 %v608
        %v737 = vcvt.s32.f32 %v609
        %v738 = vcvt.s32.f32 %v610
        %v739 = vcvt.s32.f32 %v611
        %v740 = vcvt.s32.f32 %v612
        %v741 = vcvt.s32.f32 %v613
        %v742 = vcvt.s32.f32 %v614
        %v743 = vcvt.s32.f32 %v615
        %v744 = vcvt.s32.f32 %v616
        %v745 = vcvt.s32.f32 %v617
        %v746 = vcvt.s32.f32 %v618
        %v747 = vcvt.s32.f32 %v619
        %v748 = vcvt.s32.f32 %v620
        %v749 = vcvt.s32.f32 %v621
        %v750 = vcvt.s32.f32 %v622
        %v751 = vcvt.s32.f32 %v623
        %v752 = vcvt.s32.f32 %v624
        %v753 = vcvt.s32.f32 %v625
        %v754 = vcvt.s32.f32 %v626
        %v755 = vcvt.s32.f32 %v627
        %v756 = vcvt.s32.f32 %v628
        %v757 = vcvt.s32.f32 %v629
        %v758 = vcvt.s32.f32 %v630
        %v759 = vcvt.s32.f32 %v631
        %v760 = vcvt.s32.f32 %v632
        %v761 = vcvt.s32.f32 %v633
        %v762 = vcvt.s32.f32 %v634
        %v763 = vcvt.s32.f32 %v635
        %v764 = vcvt.s32.f32 %v636
        %v765 = vcvt.s32.f32 %v637
        %v766 = vcvt.s32.f32 %v638
        %v767 = vcvt.s32.f32 %v639
        %v768 = vcvt.s32.f32 %v640
        %v769 = vcvt.s32.f32 %v641
        %v770 = vcvt.s32.f32 %v642
        %v771 = vcvt.s32.f32 %v643
        %v772 = vcvt.s32.f32 %v644
        %v773 = vcvt.s32.f32 %v645
        %v774 = vcvt.s32.f32 %v646
        %v775 = vcvt.s32.f32 %v647
        %v776 = vcvt.s32.f32 %v648
        %v777 = vcvt.s32.f32 %v649
        %v778 = vcvt.s32.f32 %v650
        %v779 = vpack.c.bf16 %v655, %v651
        %v780 = vpack.c.bf16 %v656, %v652
        %v781 = vpack.c.bf16 %v657, %v653
        %v782 = vpack.c.bf16 %v658, %v654
        %v783 = vpack.c.bf16 %v663, %v659
        %v784 = vpack.c.bf16 %v664, %v660
        %v785 = vpack.c.bf16 %v665, %v661
        %v786 = vpack.c.bf16 %v666, %v662
        %v787 = vpack.c.bf16 %v671, %v667
        %v788 = vpack.c.bf16 %v672, %v668
        %v789 = vpack.c.bf16 %v673, %v669
        %v790 = vpack.c.bf16 %v674, %v670
        %v791 = vpack.c.bf16 %v679, %v675
        %v792 = vpack.c.bf16 %v680, %v676
        %v793 = vpack.c.bf16 %v681, %v677
        %v794 = vpack.c.bf16 %v682, %v678
        %v795 = vpack.c.bf16 %v687, %v683
        %v796 = vpack.c.bf16 %v688, %v684
        %v797 = vpack.c.bf16 %v689, %v685
        %v798 = vpack.c.bf16 %v690, %v686
        %v799 = vpack.c.bf16 %v695, %v691
        %v800 = vpack.c.bf16 %v696, %v692
        %v801 = vpack.c.bf16 %v697, %v693
        %v802 = vpack.c.bf16 %v698, %v694
        %v803 = vpack.c.bf16 %v703, %v699
        %v804 = vpack.c.bf16 %v704, %v700
        %v805 = vpack.c.bf16 %v705, %v701
        %v806 = vpack.c.bf16 %v706, %v702
        %v807 = vpack.c.bf16 %v711, %v707
        %v808 = vpack.c.bf16 %v712, %v708
        %v809 = vpack.c.bf16 %v713, %v709
        %v810 = vpack.c.bf16 %v714, %v710
        %v811 = vpack.c.bf16 %v719, %v715
        %v812 = vpack.c.bf16 %v720, %v716
        %v813 = vpack.c.bf16 %v721, %v717
        %v814 = vpack.c.bf16 %v722, %v718
        %v815 = vpack.c.bf16 %v727, %v723
        %v816 = vpack.c.bf16 %v728, %v724
        %v817 = vpack.c.bf16 %v729, %v725
        %v818 = vpack.c.bf16 %v730, %v726
        %v819 = vpack.c.bf16 %v735, %v731
        %v820 = vpack.c.bf16 %v736, %v732
        %v821 = vpack.c.bf16 %v737, %v733
        %v822 = vpack.c.bf16 %v738, %v734
        %v823 = vpack.c.bf16 %v743, %v739
        %v824 = vpack.c.bf16 %v744, %v740
        %v825 = vpack.c.bf16 %v745, %v741
        %v826 = vpack.c.bf16 %v746, %v742
        %v827 = vpack.c.bf16 %v751, %v747
        %v828 = vpack.c.bf16 %v752, %v748
        %v829 = vpack.c.bf16 %v753, %v749
        %v830 = vpack.c.bf16 %v754, %v750
        %v831 = vpack.c.bf16 %v759, %v755
        %v832 = vpack.c.bf16 %v760, %v756
        %v833 = vpack.c.bf16 %v761, %v757
        %v834 = vpack.c.bf16 %v762, %v758
        %v835 = vpack.c.bf16 %v767, %v763
        %v836 = vpack.c.bf16 %v768, %v764
        %v837 = vpack.c.bf16 %v769, %v765
        %v838 = vpack.c.bf16 %v770, %v766
        %v839 = vpack.c.bf16 %v775, %v771
        %v840 = vpack.c.bf16 %v776, %v772
        %v841 = vpack.c.bf16 %v777, %v773
        %v842 = vpack.c.bf16 %v778, %v774
        %v843 = vld [vmem:[#allocation2] sm:$0xff]
        %v844 = vld [vmem:[#allocation2 + $0x10] sm:$0xff]
        %v845 = vld [vmem:[#allocation2 + $0x20] sm:$0xff]
        %v846 = vld [vmem:[#allocation2 + $0x30] sm:$0xff]
        %v847 = vld [vmem:[#allocation2 + $0x40] sm:$0xff]
        %v848 = vld [vmem:[#allocation2 + $0x50] sm:$0xff]
        %v849 = vld [vmem:[#allocation2 + $0x60] sm:$0xff]
        %v850 = vld [vmem:[#allocation2 + $0x70] sm:$0xff]
        %v851 = vld [vmem:[#allocation2 + $0x80] sm:$0xff]
        %v852 = vld [vmem:[#allocation2 + $0x90] sm:$0xff]
        %v853 = vld [vmem:[#allocation2 + $0xa0] sm:$0xff]
        %v854 = vld [vmem:[#allocation2 + $0xb0] sm:$0xff]
        %v855 = vld [vmem:[#allocation2 + $0xc0] sm:$0xff]
        %v856 = vld [vmem:[#allocation2 + $0xd0] sm:$0xff]
        %v857 = vld [vmem:[#allocation2 + $0xe0] sm:$0xff]
        %v858 = vld [vmem:[#allocation2 + $0xf0] sm:$0xff]
        %v859 = vld [vmem:[#allocation2 + $0x100] sm:$0xff]
        %v860 = vld [vmem:[#allocation2 + $0x110] sm:$0xff]
        %v861 = vld [vmem:[#allocation2 + $0x120] sm:$0xff]
        %v862 = vld [vmem:[#allocation2 + $0x130] sm:$0xff]
        %v863 = vld [vmem:[#allocation2 + $0x140] sm:$0xff]
        %v864 = vld [vmem:[#allocation2 + $0x150] sm:$0xff]
        %v865 = vld [vmem:[#allocation2 + $0x160] sm:$0xff]
        %v866 = vld [vmem:[#allocation2 + $0x170] sm:$0xff]
        %v867 = vld [vmem:[#allocation2 + $0x180] sm:$0xff]
        %v868 = vld [vmem:[#allocation2 + $0x190] sm:$0xff]
        %v869 = vld [vmem:[#allocation2 + $0x1a0] sm:$0xff]
        %v870 = vld [vmem:[#allocation2 + $0x1b0] sm:$0xff]
        %v871 = vld [vmem:[#allocation2 + $0x1c0] sm:$0xff]
        %v872 = vld [vmem:[#allocation2 + $0x1d0] sm:$0xff]
        %v873 = vld [vmem:[#allocation2 + $0x1e0] sm:$0xff]
        %v874 = vld [vmem:[#allocation2 + $0x1f0] sm:$0xff]
        %v875 = vld [vmem:[#allocation3] sm:$0xf]
        %v876 = vld [vmem:[#allocation3 + $0x4] sm:$0xf]
        %v877 = vld [vmem:[#allocation3 + $0x8] sm:$0xf]
        %v878 = vld [vmem:[#allocation3 + $0xc] sm:$0xf]
        %v879 = vld [vmem:[#allocation3 + $0x10] sm:$0xf]
        %v880 = vld [vmem:[#allocation3 + $0x14] sm:$0xf]
        %v881 = vld [vmem:[#allocation3 + $0x18] sm:$0xf]
        %v882 = vld [vmem:[#allocation3 + $0x1c] sm:$0xf]
        %v883 = vld [vmem:[#allocation3 + $0x20] sm:$0xf]
        %v884 = vld [vmem:[#allocation3 + $0x24] sm:$0xf]
        %v885 = vld [vmem:[#allocation3 + $0x28] sm:$0xf]
        %v886 = vld [vmem:[#allocation3 + $0x2c] sm:$0xf]
        %v887 = vld [vmem:[#allocation3 + $0x30] sm:$0xf]
        %v888 = vld [vmem:[#allocation3 + $0x34] sm:$0xf]
        %v889 = vld [vmem:[#allocation3 + $0x38] sm:$0xf]
        %v890 = vld [vmem:[#allocation3 + $0x3c] sm:$0xf]
        %v891 = vld [vmem:[#allocation3 + $0x40] sm:$0xf]
        %v892 = vld [vmem:[#allocation3 + $0x44] sm:$0xf]
        %v893 = vld [vmem:[#allocation3 + $0x48] sm:$0xf]
        %v894 = vld [vmem:[#allocation3 + $0x4c] sm:$0xf]
        %v895 = vld [vmem:[#allocation3 + $0x50] sm:$0xf]
        %v896 = vld [vmem:[#allocation3 + $0x54] sm:$0xf]
        %v897 = vld [vmem:[#allocation3 + $0x58] sm:$0xf]
        %v898 = vld [vmem:[#allocation3 + $0x5c] sm:$0xf]
        %v899 = vld [vmem:[#allocation3 + $0x60] sm:$0xf]
        %v900 = vld [vmem:[#allocation3 + $0x64] sm:$0xf]
        %v901 = vld [vmem:[#allocation3 + $0x68] sm:$0xf]
        %v902 = vld [vmem:[#allocation3 + $0x6c] sm:$0xf]
        %v903 = vld [vmem:[#allocation3 + $0x70] sm:$0xf]
        %v904 = vld [vmem:[#allocation3 + $0x74] sm:$0xf]
        %v905 = vld [vmem:[#allocation3 + $0x78] sm:$0xf]
        %v906 = vld [vmem:[#allocation3 + $0x7c] sm:$0xf]
        %v907 = vld [vmem:[#allocation3 + $0x80] sm:$0xf]
        %v908 = vld [vmem:[#allocation3 + $0x84] sm:$0xf]
        %v909 = vld [vmem:[#allocation3 + $0x88] sm:$0xf]
        %v910 = vld [vmem:[#allocation3 + $0x8c] sm:$0xf]
        %v911 = vld [vmem:[#allocation3 + $0x90] sm:$0xf]
        %v912 = vld [vmem:[#allocation3 + $0x94] sm:$0xf]
        %v913 = vld [vmem:[#allocation3 + $0x98] sm:$0xf]
        %v914 = vld [vmem:[#allocation3 + $0x9c] sm:$0xf]
        %v915 = vld [vmem:[#allocation3 + $0xa0] sm:$0xf]
        %v916 = vld [vmem:[#allocation3 + $0xa4] sm:$0xf]
        %v917 = vld [vmem:[#allocation3 + $0xa8] sm:$0xf]
        %v918 = vld [vmem:[#allocation3 + $0xac] sm:$0xf]
        %v919 = vld [vmem:[#allocation3 + $0xb0] sm:$0xf]
        %v920 = vld [vmem:[#allocation3 + $0xb4] sm:$0xf]
        %v921 = vld [vmem:[#allocation3 + $0xb8] sm:$0xf]
        %v922 = vld [vmem:[#allocation3 + $0xbc] sm:$0xf]
        %v923 = vld [vmem:[#allocation3 + $0xc0] sm:$0xf]
        %v924 = vld [vmem:[#allocation3 + $0xc4] sm:$0xf]
        %v925 = vld [vmem:[#allocation3 + $0xc8] sm:$0xf]
        %v926 = vld [vmem:[#allocation3 + $0xcc] sm:$0xf]
        %v927 = vld [vmem:[#allocation3 + $0xd0] sm:$0xf]
        %v928 = vld [vmem:[#allocation3 + $0xd4] sm:$0xf]
        %v929 = vld [vmem:[#allocation3 + $0xd8] sm:$0xf]
        %v930 = vld [vmem:[#allocation3 + $0xdc] sm:$0xf]
        %v931 = vld [vmem:[#allocation3 + $0xe0] sm:$0xf]
        %v932 = vld [vmem:[#allocation3 + $0xe4] sm:$0xf]
        %v933 = vld [vmem:[#allocation3 + $0xe8] sm:$0xf]
        %v934 = vld [vmem:[#allocation3 + $0xec] sm:$0xf]
        %v935 = vld [vmem:[#allocation3 + $0xf0] sm:$0xf]
        %v936 = vld [vmem:[#allocation3 + $0xf4] sm:$0xf]
        %v937 = vld [vmem:[#allocation3 + $0xf8] sm:$0xf]
        %v938 = vld [vmem:[#allocation3 + $0xfc] sm:$0xf]
        %v1003 = vunpack.c.l.b16 %v875
        %v1004 = vunpack.c.l.b16 %v876
        %v1005 = vunpack.c.l.b16 %v877
        %v1006 = vunpack.c.l.b16 %v878
        %v1007 = vunpack.c.l.b16 %v879
        %v1008 = vunpack.c.l.b16 %v880
        %v1009 = vunpack.c.l.b16 %v881
        %v1010 = vunpack.c.l.b16 %v882
        %v1011 = vunpack.c.l.b16 %v883
        %v1012 = vunpack.c.l.b16 %v884
        %v1013 = vunpack.c.l.b16 %v885
        %v1014 = vunpack.c.l.b16 %v886
        %v1015 = vunpack.c.l.b16 %v887
        %v1016 = vunpack.c.l.b16 %v888
        %v1017 = vunpack.c.l.b16 %v889
        %v1018 = vunpack.c.l.b16 %v890
        %v1019 = vunpack.c.l.b16 %v891
        %v1020 = vunpack.c.l.b16 %v892
        %v1021 = vunpack.c.l.b16 %v893
        %v1022 = vunpack.c.l.b16 %v894
        %v1023 = vunpack.c.l.b16 %v895
        %v1024 = vunpack.c.l.b16 %v896
        %v1025 = vunpack.c.l.b16 %v897
        %v1026 = vunpack.c.l.b16 %v898
        %v1027 = vunpack.c.l.b16 %v899
        %v1028 = vunpack.c.l.b16 %v900
        %v1029 = vunpack.c.l.b16 %v901
        %v1030 = vunpack.c.l.b16 %v902
        %v1031 = vunpack.c.l.b16 %v903
        %v1032 = vunpack.c.l.b16 %v904
        %v1033 = vunpack.c.l.b16 %v905
        %v1034 = vunpack.c.l.b16 %v906
        %v1035 = vunpack.c.l.b16 %v907
        %v1036 = vunpack.c.l.b16 %v908
        %v1037 = vunpack.c.l.b16 %v909
        %v1038 = vunpack.c.l.b16 %v910
        %v1039 = vunpack.c.l.b16 %v911
        %v1040 = vunpack.c.l.b16 %v912
        %v1041 = vunpack.c.l.b16 %v913
        %v1042 = vunpack.c.l.b16 %v914
        %v1043 = vunpack.c.l.b16 %v915
        %v1044 = vunpack.c.l.b16 %v916
        %v1045 = vunpack.c.l.b16 %v917
        %v1046 = vunpack.c.l.b16 %v918
        %v1047 = vunpack.c.l.b16 %v919
        %v1048 = vunpack.c.l.b16 %v920
        %v1049 = vunpack.c.l.b16 %v921
        %v1050 = vunpack.c.l.b16 %v922
        %v1051 = vunpack.c.l.b16 %v923
        %v1052 = vunpack.c.l.b16 %v924
        %v1053 = vunpack.c.l.b16 %v925
        %v1054 = vunpack.c.l.b16 %v926
        %v1055 = vunpack.c.l.b16 %v927
        %v1056 = vunpack.c.l.b16 %v928
        %v1057 = vunpack.c.l.b16 %v929
        %v1058 = vunpack.c.l.b16 %v930
        %v1059 = vunpack.c.l.b16 %v931
        %v1060 = vunpack.c.l.b16 %v932
        %v1061 = vunpack.c.l.b16 %v933
        %v1062 = vunpack.c.l.b16 %v934
        %v1063 = vunpack.c.l.b16 %v935
        %v1064 = vunpack.c.l.b16 %v936
        %v1065 = vunpack.c.l.b16 %v937
        %v1066 = vunpack.c.l.b16 %v938
        %v1067 = vpack.c.b16 %v1004, %v1003
        %v1068 = vpack.c.b16 %v1006, %v1005
        %v1069 = vpack.c.b16 %v1008, %v1007
        %v1070 = vpack.c.b16 %v1010, %v1009
        %v1071 = vpack.c.b16 %v1012, %v1011
        %v1072 = vpack.c.b16 %v1014, %v1013
        %v1073 = vpack.c.b16 %v1016, %v1015
        %v1074 = vpack.c.b16 %v1018, %v1017
        %v1075 = vpack.c.b16 %v1020, %v1019
        %v1076 = vpack.c.b16 %v1022, %v1021
        %v1077 = vpack.c.b16 %v1024, %v1023
        %v1078 = vpack.c.b16 %v1026, %v1025
        %v1079 = vpack.c.b16 %v1028, %v1027
        %v1080 = vpack.c.b16 %v1030, %v1029
        %v1081 = vpack.c.b16 %v1032, %v1031
        %v1082 = vpack.c.b16 %v1034, %v1033
        %v1083 = vpack.c.b16 %v1036, %v1035
        %v1084 = vpack.c.b16 %v1038, %v1037
        %v1085 = vpack.c.b16 %v1040, %v1039
        %v1086 = vpack.c.b16 %v1042, %v1041
        %v1087 = vpack.c.b16 %v1044, %v1043
        %v1088 = vpack.c.b16 %v1046, %v1045
        %v1089 = vpack.c.b16 %v1048, %v1047
        %v1090 = vpack.c.b16 %v1050, %v1049
        %v1091 = vpack.c.b16 %v1052, %v1051
        %v1092 = vpack.c.b16 %v1054, %v1053
        %v1093 = vpack.c.b16 %v1056, %v1055
        %v1094 = vpack.c.b16 %v1058, %v1057
        %v1095 = vpack.c.b16 %v1060, %v1059
        %v1096 = vpack.c.b16 %v1062, %v1061
        %v1097 = vpack.c.b16 %v1064, %v1063
        %v1098 = vpack.c.b16 %v1066, %v1065
        %1131 = vmatpush.bf16.msra.mxu0 %v1074
        %1132 = vmatpush.bf16.msra.mxu0 %v1073
        %1133 = vmatpush.bf16.msra.mxu0 %v1072
        %1134 = vmatpush.bf16.msra.mxu0 %v1071
        %1135 = vmatpush.bf16.msra.mxu0 %v1070
        %1136 = vmatpush.bf16.msra.mxu0 %v1069
        %1137 = vmatpush.bf16.msra.mxu0 %v1068
        %1138 = vmatpush.bf16.msra.mxu0 %v1067
        %1139 = vmatmul.bf16.gmra.mxu0 %v779
        %v1140 = vpop.f32.mrf.mxu0
        %v1141 = vadd.f32 0.0, %v1140
        %v1142 = vpop.f32.mrf.mxu0
        %v1143 = vadd.f32 0.0, %v1142
        %1144 = vmatmul.bf16.gmra.mxu0 %v783
        %v1145 = vpop.f32.mrf.mxu0
        %v1146 = vadd.f32 0.0, %v1145
        %v1147 = vpop.f32.mrf.mxu0
        %v1148 = vadd.f32 0.0, %v1147
        %1149 = vmatmul.bf16.gmra.mxu0 %v787
        %v1150 = vpop.f32.mrf.mxu0
        %v1151 = vadd.f32 0.0, %v1150
        %v1152 = vpop.f32.mrf.mxu0
        %v1153 = vadd.f32 0.0, %v1152
        %1154 = vmatmul.bf16.gmra.mxu0 %v791
        %v1155 = vpop.f32.mrf.mxu0
        %v1156 = vadd.f32 0.0, %v1155
        %v1157 = vpop.f32.mrf.mxu0
        %v1158 = vadd.f32 0.0, %v1157
        %1159 = vmatmul.bf16.gmra.mxu0 %v795
        %v1160 = vpop.f32.mrf.mxu0
        %v1161 = vadd.f32 0.0, %v1160
        %v1162 = vpop.f32.mrf.mxu0
        %v1163 = vadd.f32 0.0, %v1162
        %1164 = vmatmul.bf16.gmra.mxu0 %v799
        %v1165 = vpop.f32.mrf.mxu0
        %v1166 = vadd.f32 0.0, %v1165
        %v1167 = vpop.f32.mrf.mxu0
        %v1168 = vadd.f32 0.0, %v1167
        %1169 = vmatmul.bf16.gmra.mxu0 %v803
        %v1170 = vpop.f32.mrf.mxu0
        %v1171 = vadd.f32 0.0, %v1170
        %v1172 = vpop.f32.mrf.mxu0
        %v1173 = vadd.f32 0.0, %v1172
        %1174 = vmatmul.bf16.gmra.mxu0 %v807
        %v1175 = vpop.f32.mrf.mxu0
        %v1176 = vadd.f32 0.0, %v1175
        %v1177 = vpop.f32.mrf.mxu0
        %v1178 = vadd.f32 0.0, %v1177
        %1179 = vmatmul.bf16.gmra.mxu0 %v811
        %v1180 = vpop.f32.mrf.mxu0
        %v1181 = vadd.f32 0.0, %v1180
        %v1182 = vpop.f32.mrf.mxu0
        %v1183 = vadd.f32 0.0, %v1182
        %1184 = vmatmul.bf16.gmra.mxu0 %v815
        %v1185 = vpop.f32.mrf.mxu0
        %v1186 = vadd.f32 0.0, %v1185
        %v1187 = vpop.f32.mrf.mxu0
        %v1188 = vadd.f32 0.0, %v1187
        %1189 = vmatmul.bf16.gmra.mxu0 %v819
        %v1190 = vpop.f32.mrf.mxu0
        %v1191 = vadd.f32 0.0, %v1190
        %v1192 = vpop.f32.mrf.mxu0
        %v1193 = vadd.f32 0.0, %v1192
        %1194 = vmatmul.bf16.gmra.mxu0 %v823
        %v1195 = vpop.f32.mrf.mxu0
        %v1196 = vadd.f32 0.0, %v1195
        %v1197 = vpop.f32.mrf.mxu0
        %v1198 = vadd.f32 0.0, %v1197
        %1199 = vmatmul.bf16.gmra.mxu0 %v827
        %v1200 = vpop.f32.mrf.mxu0
        %v1201 = vadd.f32 0.0, %v1200
        %v1202 = vpop.f32.mrf.mxu0
        %v1203 = vadd.f32 0.0, %v1202
        %1204 = vmatmul.bf16.gmra.mxu0 %v831
        %v1205 = vpop.f32.mrf.mxu0
        %v1206 = vadd.f32 0.0, %v1205
        %v1207 = vpop.f32.mrf.mxu0
        %v1208 = vadd.f32 0.0, %v1207
        %1209 = vmatmul.bf16.gmra.mxu0 %v835
        %v1210 = vpop.f32.mrf.mxu0
        %v1211 = vadd.f32 0.0, %v1210
        %v1212 = vpop.f32.mrf.mxu0
        %v1213 = vadd.f32 0.0, %v1212
        %1214 = vmatmul.bf16.gmra.mxu0 %v839
        %v1215 = vpop.f32.mrf.mxu0
        %v1216 = vadd.f32 0.0, %v1215
        %v1217 = vpop.f32.mrf.mxu0
        %v1218 = vadd.f32 0.0, %v1217
        %1219 = vdwg.mxu0
        %1220 = vmatpush.bf16.msra.mxu0 %v1082
        %1221 = vmatpush.bf16.msra.mxu0 %v1081
        %1222 = vmatpush.bf16.msra.mxu0 %v1080
        %1223 = vmatpush.bf16.msra.mxu0 %v1079
        %1224 = vmatpush.bf16.msra.mxu0 %v1078
        %1225 = vmatpush.bf16.msra.mxu0 %v1077
        %1226 = vmatpush.bf16.msra.mxu0 %v1076
        %1227 = vmatpush.bf16.msra.mxu0 %v1075
        %1228 = vmatmul.bf16.gmra.mxu0 %v780
        %v1229 = vpop.f32.mrf.mxu0
        %v1230 = vadd.f32 %v1141, %v1229
        %v1231 = vpop.f32.mrf.mxu0
        %v1232 = vadd.f32 %v1143, %v1231
        %1233 = vmatmul.bf16.gmra.mxu0 %v784
        %v1234 = vpop.f32.mrf.mxu0
        %v1235 = vadd.f32 %v1146, %v1234
        %v1236 = vpop.f32.mrf.mxu0
        %v1237 = vadd.f32 %v1148, %v1236
        %1238 = vmatmul.bf16.gmra.mxu0 %v788
        %v1239 = vpop.f32.mrf.mxu0
        %v1240 = vadd.f32 %v1151, %v1239
        %v1241 = vpop.f32.mrf.mxu0
        %v1242 = vadd.f32 %v1153, %v1241
        %1243 = vmatmul.bf16.gmra.mxu0 %v792
        %v1244 = vpop.f32.mrf.mxu0
        %v1245 = vadd.f32 %v1156, %v1244
        %v1246 = vpop.f32.mrf.mxu0
        %v1247 = vadd.f32 %v1158, %v1246
        %1248 = vmatmul.bf16.gmra.mxu0 %v796
        %v1249 = vpop.f32.mrf.mxu0
        %v1250 = vadd.f32 %v1161, %v1249
        %v1251 = vpop.f32.mrf.mxu0
        %v1252 = vadd.f32 %v1163, %v1251
        %1253 = vmatmul.bf16.gmra.mxu0 %v800
        %v1254 = vpop.f32.mrf.mxu0
        %v1255 = vadd.f32 %v1166, %v1254
        %v1256 = vpop.f32.mrf.mxu0
        %v1257 = vadd.f32 %v1168, %v1256
        %1258 = vmatmul.bf16.gmra.mxu0 %v804
        %v1259 = vpop.f32.mrf.mxu0
        %v1260 = vadd.f32 %v1171, %v1259
        %v1261 = vpop.f32.mrf.mxu0
        %v1262 = vadd.f32 %v1173, %v1261
        %1263 = vmatmul.bf16.gmra.mxu0 %v808
        %v1264 = vpop.f32.mrf.mxu0
        %v1265 = vadd.f32 %v1176, %v1264
        %v1266 = vpop.f32.mrf.mxu0
        %v1267 = vadd.f32 %v1178, %v1266
        %1268 = vmatmul.bf16.gmra.mxu0 %v812
        %v1269 = vpop.f32.mrf.mxu0
        %v1270 = vadd.f32 %v1181, %v1269
        %v1271 = vpop.f32.mrf.mxu0
        %v1272 = vadd.f32 %v1183, %v1271
        %1273 = vmatmul.bf16.gmra.mxu0 %v816
        %v1274 = vpop.f32.mrf.mxu0
        %v1275 = vadd.f32 %v1186, %v1274
        %v1276 = vpop.f32.mrf.mxu0
        %v1277 = vadd.f32 %v1188, %v1276
        %1278 = vmatmul.bf16.gmra.mxu0 %v820
        %v1279 = vpop.f32.mrf.mxu0
        %v1280 = vadd.f32 %v1191, %v1279
        %v1281 = vpop.f32.mrf.mxu0
        %v1282 = vadd.f32 %v1193, %v1281
        %1283 = vmatmul.bf16.gmra.mxu0 %v824
        %v1284 = vpop.f32.mrf.mxu0
        %v1285 = vadd.f32 %v1196, %v1284
        %v1286 = vpop.f32.mrf.mxu0
        %v1287 = vadd.f32 %v1198, %v1286
        %1288 = vmatmul.bf16.gmra.mxu0 %v828
        %v1289 = vpop.f32.mrf.mxu0
        %v1290 = vadd.f32 %v1201, %v1289
        %v1291 = vpop.f32.mrf.mxu0
        %v1292 = vadd.f32 %v1203, %v1291
        %1293 = vmatmul.bf16.gmra.mxu0 %v832
        %v1294 = vpop.f32.mrf.mxu0
        %v1295 = vadd.f32 %v1206, %v1294
        %v1296 = vpop.f32.mrf.mxu0
        %v1297 = vadd.f32 %v1208, %v1296
        %1298 = vmatmul.bf16.gmra.mxu0 %v836
        %v1299 = vpop.f32.mrf.mxu0
        %v1300 = vadd.f32 %v1211, %v1299
        %v1301 = vpop.f32.mrf.mxu0
        %v1302 = vadd.f32 %v1213, %v1301
        %1303 = vmatmul.bf16.gmra.mxu0 %v840
        %v1304 = vpop.f32.mrf.mxu0
        %v1305 = vadd.f32 %v1216, %v1304
        %v1306 = vpop.f32.mrf.mxu0
        %v1307 = vadd.f32 %v1218, %v1306
        %1308 = vdwg.mxu0
        %1309 = vmatpush.bf16.msra.mxu0 %v1090
        %1310 = vmatpush.bf16.msra.mxu0 %v1089
        %1311 = vmatpush.bf16.msra.mxu0 %v1088
        %1312 = vmatpush.bf16.msra.mxu0 %v1087
        %1313 = vmatpush.bf16.msra.mxu0 %v1086
        %1314 = vmatpush.bf16.msra.mxu0 %v1085
        %1315 = vmatpush.bf16.msra.mxu0 %v1084
        %1316 = vmatpush.bf16.msra.mxu0 %v1083
        %1317 = vmatmul.bf16.gmra.mxu0 %v781
        %v1318 = vpop.f32.mrf.mxu0
        %v1319 = vadd.f32 %v1230, %v1318
        %v1320 = vpop.f32.mrf.mxu0
        %v1321 = vadd.f32 %v1232, %v1320
        %1322 = vmatmul.bf16.gmra.mxu0 %v785
        %v1323 = vpop.f32.mrf.mxu0
        %v1324 = vadd.f32 %v1235, %v1323
        %v1325 = vpop.f32.mrf.mxu0
        %v1326 = vadd.f32 %v1237, %v1325
        %1327 = vmatmul.bf16.gmra.mxu0 %v789
        %v1328 = vpop.f32.mrf.mxu0
        %v1329 = vadd.f32 %v1240, %v1328
        %v1330 = vpop.f32.mrf.mxu0
        %v1331 = vadd.f32 %v1242, %v1330
        %1332 = vmatmul.bf16.gmra.mxu0 %v793
        %v1333 = vpop.f32.mrf.mxu0
        %v1334 = vadd.f32 %v1245, %v1333
        %v1335 = vpop.f32.mrf.mxu0
        %v1336 = vadd.f32 %v1247, %v1335
        %1337 = vmatmul.bf16.gmra.mxu0 %v797
        %v1338 = vpop.f32.mrf.mxu0
        %v1339 = vadd.f32 %v1250, %v1338
        %v1340 = vpop.f32.mrf.mxu0
        %v1341 = vadd.f32 %v1252, %v1340
        %1342 = vmatmul.bf16.gmra.mxu0 %v801
        %v1343 = vpop.f32.mrf.mxu0
        %v1344 = vadd.f32 %v1255, %v1343
        %v1345 = vpop.f32.mrf.mxu0
        %v1346 = vadd.f32 %v1257, %v1345
        %1347 = vmatmul.bf16.gmra.mxu0 %v805
        %v1348 = vpop.f32.mrf.mxu0
        %v1349 = vadd.f32 %v1260, %v1348
        %v1350 = vpop.f32.mrf.mxu0
        %v1351 = vadd.f32 %v1262, %v1350
        %1352 = vmatmul.bf16.gmra.mxu0 %v809
        %v1353 = vpop.f32.mrf.mxu0
        %v1354 = vadd.f32 %v1265, %v1353
        %v1355 = vpop.f32.mrf.mxu0
        %v1356 = vadd.f32 %v1267, %v1355
        %1357 = vmatmul.bf16.gmra.mxu0 %v813
        %v1358 = vpop.f32.mrf.mxu0
        %v1359 = vadd.f32 %v1270, %v1358
        %v1360 = vpop.f32.mrf.mxu0
        %v1361 = vadd.f32 %v1272, %v1360
        %1362 = vmatmul.bf16.gmra.mxu0 %v817
        %v1363 = vpop.f32.mrf.mxu0
        %v1364 = vadd.f32 %v1275, %v1363
        %v1365 = vpop.f32.mrf.mxu0
        %v1366 = vadd.f32 %v1277, %v1365
        %1367 = vmatmul.bf16.gmra.mxu0 %v821
        %v1368 = vpop.f32.mrf.mxu0
        %v1369 = vadd.f32 %v1280, %v1368
        %v1370 = vpop.f32.mrf.mxu0
        %v1371 = vadd.f32 %v1282, %v1370
        %1372 = vmatmul.bf16.gmra.mxu0 %v825
        %v1373 = vpop.f32.mrf.mxu0
        %v1374 = vadd.f32 %v1285, %v1373
        %v1375 = vpop.f32.mrf.mxu0
        %v1376 = vadd.f32 %v1287, %v1375
        %1377 = vmatmul.bf16.gmra.mxu0 %v829
        %v1378 = vpop.f32.mrf.mxu0
        %v1379 = vadd.f32 %v1290, %v1378
        %v1380 = vpop.f32.mrf.mxu0
        %v1381 = vadd.f32 %v1292, %v1380
        %1382 = vmatmul.bf16.gmra.mxu0 %v833
        %v1383 = vpop.f32.mrf.mxu0
        %v1384 = vadd.f32 %v1295, %v1383
        %v1385 = vpop.f32.mrf.mxu0
        %v1386 = vadd.f32 %v1297, %v1385
        %1387 = vmatmul.bf16.gmra.mxu0 %v837
        %v1388 = vpop.f32.mrf.mxu0
        %v1389 = vadd.f32 %v1300, %v1388
        %v1390 = vpop.f32.mrf.mxu0
        %v1391 = vadd.f32 %v1302, %v1390
        %1392 = vmatmul.bf16.gmra.mxu0 %v841
        %v1393 = vpop.f32.mrf.mxu0
        %v1394 = vadd.f32 %v1305, %v1393
        %v1395 = vpop.f32.mrf.mxu0
        %v1396 = vadd.f32 %v1307, %v1395
        %1397 = vdwg.mxu0
        %1398 = vmatpush.bf16.msra.mxu0 %v1098
        %1399 = vmatpush.bf16.msra.mxu0 %v1097
        %1400 = vmatpush.bf16.msra.mxu0 %v1096
        %1401 = vmatpush.bf16.msra.mxu0 %v1095
        %1402 = vmatpush.bf16.msra.mxu0 %v1094
        %1403 = vmatpush.bf16.msra.mxu0 %v1093
        %1404 = vmatpush.bf16.msra.mxu0 %v1092
        %1405 = vmatpush.bf16.msra.mxu0 %v1091
        %1406 = vmatmul.bf16.gmra.mxu0 %v782
        %v1407 = vpop.f32.mrf.mxu0
        %v1408 = vadd.f32 %v1319, %v1407
        %v1409 = vpop.f32.mrf.mxu0
        %v1410 = vadd.f32 %v1321, %v1409
        %1411 = vmatmul.bf16.gmra.mxu0 %v786
        %v1412 = vpop.f32.mrf.mxu0
        %v1413 = vadd.f32 %v1324, %v1412
        %v1414 = vpop.f32.mrf.mxu0
        %v1415 = vadd.f32 %v1326, %v1414
        %1416 = vmatmul.bf16.gmra.mxu0 %v790
        %v1417 = vpop.f32.mrf.mxu0
        %v1418 = vadd.f32 %v1329, %v1417
        %v1419 = vpop.f32.mrf.mxu0
        %v1420 = vadd.f32 %v1331, %v1419
        %1421 = vmatmul.bf16.gmra.mxu0 %v794
        %v1422 = vpop.f32.mrf.mxu0
        %v1423 = vadd.f32 %v1334, %v1422
        %v1424 = vpop.f32.mrf.mxu0
        %v1425 = vadd.f32 %v1336, %v1424
        %1426 = vmatmul.bf16.gmra.mxu0 %v798
        %v1427 = vpop.f32.mrf.mxu0
        %v1428 = vadd.f32 %v1339, %v1427
        %v1429 = vpop.f32.mrf.mxu0
        %v1430 = vadd.f32 %v1341, %v1429
        %1431 = vmatmul.bf16.gmra.mxu0 %v802
        %v1432 = vpop.f32.mrf.mxu0
        %v1433 = vadd.f32 %v1344, %v1432
        %v1434 = vpop.f32.mrf.mxu0
        %v1435 = vadd.f32 %v1346, %v1434
        %1436 = vmatmul.bf16.gmra.mxu0 %v806
        %v1437 = vpop.f32.mrf.mxu0
        %v1438 = vadd.f32 %v1349, %v1437
        %v1439 = vpop.f32.mrf.mxu0
        %v1440 = vadd.f32 %v1351, %v1439
        %1441 = vmatmul.bf16.gmra.mxu0 %v810
        %v1442 = vpop.f32.mrf.mxu0
        %v1443 = vadd.f32 %v1354, %v1442
        %v1444 = vpop.f32.mrf.mxu0
        %v1445 = vadd.f32 %v1356, %v1444
        %1446 = vmatmul.bf16.gmra.mxu0 %v814
        %v1447 = vpop.f32.mrf.mxu0
        %v1448 = vadd.f32 %v1359, %v1447
        %v1449 = vpop.f32.mrf.mxu0
        %v1450 = vadd.f32 %v1361, %v1449
        %1451 = vmatmul.bf16.gmra.mxu0 %v818
        %v1452 = vpop.f32.mrf.mxu0
        %v1453 = vadd.f32 %v1364, %v1452
        %v1454 = vpop.f32.mrf.mxu0
        %v1455 = vadd.f32 %v1366, %v1454
        %1456 = vmatmul.bf16.gmra.mxu0 %v822
        %v1457 = vpop.f32.mrf.mxu0
        %v1458 = vadd.f32 %v1369, %v1457
        %v1459 = vpop.f32.mrf.mxu0
        %v1460 = vadd.f32 %v1371, %v1459
        %1461 = vmatmul.bf16.gmra.mxu0 %v826
        %v1462 = vpop.f32.mrf.mxu0
        %v1463 = vadd.f32 %v1374, %v1462
        %v1464 = vpop.f32.mrf.mxu0
        %v1465 = vadd.f32 %v1376, %v1464
        %1466 = vmatmul.bf16.gmra.mxu0 %v830
        %v1467 = vpop.f32.mrf.mxu0
        %v1468 = vadd.f32 %v1379, %v1467
        %v1469 = vpop.f32.mrf.mxu0
        %v1470 = vadd.f32 %v1381, %v1469
        %1471 = vmatmul.bf16.gmra.mxu0 %v834
        %v1472 = vpop.f32.mrf.mxu0
        %v1473 = vadd.f32 %v1384, %v1472
        %v1474 = vpop.f32.mrf.mxu0
        %v1475 = vadd.f32 %v1386, %v1474
        %1476 = vmatmul.bf16.gmra.mxu0 %v838
        %v1477 = vpop.f32.mrf.mxu0
        %v1478 = vadd.f32 %v1389, %v1477
        %v1479 = vpop.f32.mrf.mxu0
        %v1480 = vadd.f32 %v1391, %v1479
        %1481 = vmatmul.bf16.gmra.mxu0 %v842
        %v1482 = vpop.f32.mrf.mxu0
        %v1483 = vadd.f32 %v1394, %v1482
        %v1484 = vpop.f32.mrf.mxu0
        %v1485 = vadd.f32 %v1396, %v1484
        %1486 = vdwg.mxu0
        %v1487 = vadd.f32 %v843, %v1408
        %v1488 = vadd.f32 %v844, %v1410
        %v1489 = vadd.f32 %v845, %v1413
        %v1490 = vadd.f32 %v846, %v1415
        %v1491 = vadd.f32 %v847, %v1418
        %v1492 = vadd.f32 %v848, %v1420
        %v1493 = vadd.f32 %v849, %v1423
        %v1494 = vadd.f32 %v850, %v1425
        %v1495 = vadd.f32 %v851, %v1428
        %v1496 = vadd.f32 %v852, %v1430
        %v1497 = vadd.f32 %v853, %v1433
        %v1498 = vadd.f32 %v854, %v1435
        %v1499 = vadd.f32 %v855, %v1438
        %v1500 = vadd.f32 %v856, %v1440
        %v1501 = vadd.f32 %v857, %v1443
        %v1502 = vadd.f32 %v858, %v1445
        %v1503 = vadd.f32 %v859, %v1448
        %v1504 = vadd.f32 %v860, %v1450
        %v1505 = vadd.f32 %v861, %v1453
        %v1506 = vadd.f32 %v862, %v1455
        %v1507 = vadd.f32 %v863, %v1458
        %v1508 = vadd.f32 %v864, %v1460
        %v1509 = vadd.f32 %v865, %v1463
        %v1510 = vadd.f32 %v866, %v1465
        %v1511 = vadd.f32 %v867, %v1468
        %v1512 = vadd.f32 %v868, %v1470
        %v1513 = vadd.f32 %v869, %v1473
        %v1514 = vadd.f32 %v870, %v1475
        %v1515 = vadd.f32 %v871, %v1478
        %v1516 = vadd.f32 %v872, %v1480
        %v1517 = vadd.f32 %v873, %v1483
        %v1518 = vadd.f32 %v874, %v1485
        %1519 = vst [vmem:[#allocation2] sm:$0xff] %v1487
        %1520 = vst [vmem:[#allocation2 + $0x10] sm:$0xff] %v1488
        %1521 = vst [vmem:[#allocation2 + $0x20] sm:$0xff] %v1489
        %1522 = vst [vmem:[#allocation2 + $0x30] sm:$0xff] %v1490
        %1523 = vst [vmem:[#allocation2 + $0x40] sm:$0xff] %v1491
        %1524 = vst [vmem:[#allocation2 + $0x50] sm:$0xff] %v1492
        %1525 = vst [vmem:[#allocation2 + $0x60] sm:$0xff] %v1493
        %1526 = vst [vmem:[#allocation2 + $0x70] sm:$0xff] %v1494
        %1527 = vst [vmem:[#allocation2 + $0x80] sm:$0xff] %v1495
        %1528 = vst [vmem:[#allocation2 + $0x90] sm:$0xff] %v1496
        %1529 = vst [vmem:[#allocation2 + $0xa0] sm:$0xff] %v1497
        %1530 = vst [vmem:[#allocation2 + $0xb0] sm:$0xff] %v1498
        %1531 = vst [vmem:[#allocation2 + $0xc0] sm:$0xff] %v1499
        %1532 = vst [vmem:[#allocation2 + $0xd0] sm:$0xff] %v1500
        %1533 = vst [vmem:[#allocation2 + $0xe0] sm:$0xff] %v1501
        %1534 = vst [vmem:[#allocation2 + $0xf0] sm:$0xff] %v1502
        %1535 = vst [vmem:[#allocation2 + $0x100] sm:$0xff] %v1503
        %1536 = vst [vmem:[#allocation2 + $0x110] sm:$0xff] %v1504
        %1537 = vst [vmem:[#allocation2 + $0x120] sm:$0xff] %v1505
        %1538 = vst [vmem:[#allocation2 + $0x130] sm:$0xff] %v1506
        %1539 = vst [vmem:[#allocation2 + $0x140] sm:$0xff] %v1507
        %1540 = vst [vmem:[#allocation2 + $0x150] sm:$0xff] %v1508
        %1541 = vst [vmem:[#allocation2 + $0x160] sm:$0xff] %v1509
        %1542 = vst [vmem:[#allocation2 + $0x170] sm:$0xff] %v1510
        %1543 = vst [vmem:[#allocation2 + $0x180] sm:$0xff] %v1511
        %1544 = vst [vmem:[#allocation2 + $0x190] sm:$0xff] %v1512
        %1545 = vst [vmem:[#allocation2 + $0x1a0] sm:$0xff] %v1513
        %1546 = vst [vmem:[#allocation2 + $0x1b0] sm:$0xff] %v1514
        %1547 = vst [vmem:[#allocation2 + $0x1c0] sm:$0xff] %v1515
        %1548 = vst [vmem:[#allocation2 + $0x1d0] sm:$0xff] %v1516
        %1549 = vst [vmem:[#allocation2 + $0x1e0] sm:$0xff] %v1517
        %1550 = vst [vmem:[#allocation2 + $0x1f0] sm:$0xff] %v1518
        // Predicated region
        $region61: #{tpu_custom_call.1} parent=43 // pred_check
          %p1551 = pneg %p391
        $region62: #{tpu_custom_call.1} parent=43 // pred_check_branch
          %1553 = sbr.rel (%p1551) target = $region64
        $region63: #{tpu_custom_call.1} parent=43 // pred_region
          %v1554 = vld [vmem:[#allocation2] sm:$0xff]
          %v1555 = vld [vmem:[#allocation2 + $0x10] sm:$0xff]
          %v1556 = vld [vmem:[#allocation2 + $0x20] sm:$0xff]
          %v1557 = vld [vmem:[#allocation2 + $0x30] sm:$0xff]
          %v1558 = vld [vmem:[#allocation2 + $0x40] sm:$0xff]
          %v1559 = vld [vmem:[#allocation2 + $0x50] sm:$0xff]
          %v1560 = vld [vmem:[#allocation2 + $0x60] sm:$0xff]
          %v1561 = vld [vmem:[#allocation2 + $0x70] sm:$0xff]
          %v1562 = vld [vmem:[#allocation2 + $0x80] sm:$0xff]
          %v1563 = vld [vmem:[#allocation2 + $0x90] sm:$0xff]
          %v1564 = vld [vmem:[#allocation2 + $0xa0] sm:$0xff]
          %v1565 = vld [vmem:[#allocation2 + $0xb0] sm:$0xff]
          %v1566 = vld [vmem:[#allocation2 + $0xc0] sm:$0xff]
          %v1567 = vld [vmem:[#allocation2 + $0xd0] sm:$0xff]
          %v1568 = vld [vmem:[#allocation2 + $0xe0] sm:$0xff]
          %v1569 = vld [vmem:[#allocation2 + $0xf0] sm:$0xff]
          %v1570 = vld [vmem:[#allocation2 + $0x100] sm:$0xff]
          %v1571 = vld [vmem:[#allocation2 + $0x110] sm:$0xff]
          %v1572 = vld [vmem:[#allocation2 + $0x120] sm:$0xff]
          %v1573 = vld [vmem:[#allocation2 + $0x130] sm:$0xff]
          %v1574 = vld [vmem:[#allocation2 + $0x140] sm:$0xff]
          %v1575 = vld [vmem:[#allocation2 + $0x150] sm:$0xff]
          %v1576 = vld [vmem:[#allocation2 + $0x160] sm:$0xff]
          %v1577 = vld [vmem:[#allocation2 + $0x170] sm:$0xff]
          %v1578 = vld [vmem:[#allocation2 + $0x180] sm:$0xff]
          %v1579 = vld [vmem:[#allocation2 + $0x190] sm:$0xff]
          %v1580 = vld [vmem:[#allocation2 + $0x1a0] sm:$0xff]
          %v1581 = vld [vmem:[#allocation2 + $0x1b0] sm:$0xff]
          %v1582 = vld [vmem:[#allocation2 + $0x1c0] sm:$0xff]
          %v1583 = vld [vmem:[#allocation2 + $0x1d0] sm:$0xff]
          %v1584 = vld [vmem:[#allocation2 + $0x1e0] sm:$0xff]
          %v1585 = vld [vmem:[#allocation2 + $0x1f0] sm:$0xff]
          %v1586 = vld [vmem:[%s386] sm:$0xff]
          %v1587 = vld [vmem:[%s386 + $0x8] sm:$0xff]
          %v1588 = vld [vmem:[%s386 + $0x10] sm:$0xff]
          %v1589 = vld [vmem:[%s386 + $0x18] sm:$0xff]
          %v1590 = vld [vmem:[%s386 + $0x20] sm:$0xff]
          %v1591 = vld [vmem:[%s386 + $0x28] sm:$0xff]
          %v1592 = vld [vmem:[%s386 + $0x30] sm:$0xff]
          %v1593 = vld [vmem:[%s386 + $0x38] sm:$0xff]
          %v1594 = vld [vmem:[%s386 + $0x40] sm:$0xff]
          %v1595 = vld [vmem:[%s386 + $0x48] sm:$0xff]
          %v1596 = vld [vmem:[%s386 + $0x50] sm:$0xff]
          %v1597 = vld [vmem:[%s386 + $0x58] sm:$0xff]
          %v1598 = vld [vmem:[%s386 + $0x60] sm:$0xff]
          %v1599 = vld [vmem:[%s386 + $0x68] sm:$0xff]
          %v1600 = vld [vmem:[%s386 + $0x70] sm:$0xff]
          %v1601 = vld [vmem:[%s386 + $0x78] sm:$0xff]
          %v1602 = vld [vmem:[%s386 + $0x80] sm:$0xff]
          %v1603 = vld [vmem:[%s386 + $0x88] sm:$0xff]
          %v1604 = vld [vmem:[%s386 + $0x90] sm:$0xff]
          %v1605 = vld [vmem:[%s386 + $0x98] sm:$0xff]
          %v1606 = vld [vmem:[%s386 + $0xa0] sm:$0xff]
          %v1607 = vld [vmem:[%s386 + $0xa8] sm:$0xff]
          %v1608 = vld [vmem:[%s386 + $0xb0] sm:$0xff]
          %v1609 = vld [vmem:[%s386 + $0xb8] sm:$0xff]
          %v1610 = vld [vmem:[%s386 + $0xc0] sm:$0xff]
          %v1611 = vld [vmem:[%s386 + $0xc8] sm:$0xff]
          %v1612 = vld [vmem:[%s386 + $0xd0] sm:$0xff]
          %v1613 = vld [vmem:[%s386 + $0xd8] sm:$0xff]
          %v1614 = vld [vmem:[%s386 + $0xe0] sm:$0xff]
          %v1615 = vld [vmem:[%s386 + $0xe8] sm:$0xff]
          %v1616 = vld [vmem:[%s386 + $0xf0] sm:$0xff]
          %v1617 = vld [vmem:[%s386 + $0xf8] sm:$0xff]
          %1619 = vset.pattern.permute.xlu0 0
          %1620 = vperm.xlu0 %1619, %v1586
          %v1621 = vpop.permute.xlu0 %1620
          %1624 = vset.pattern.permute.xlu0 0
          %1625 = vperm.xlu0 %1624, %v1587
          %v1626 = vpop.permute.xlu0 %1625
          %1629 = vset.pattern.permute.xlu0 0
          %1630 = vperm.xlu0 %1629, %v1588
          %v1631 = vpop.permute.xlu0 %1630
          %1634 = vset.pattern.permute.xlu0 0
          %1635 = vperm.xlu0 %1634, %v1589
          %v1636 = vpop.permute.xlu0 %1635
          %1639 = vset.pattern.permute.xlu0 0
          %1640 = vperm.xlu0 %1639, %v1590
          %v1641 = vpop.permute.xlu0 %1640
          %1644 = vset.pattern.permute.xlu0 0
          %1645 = vperm.xlu0 %1644, %v1591
          %v1646 = vpop.permute.xlu0 %1645
          %1649 = vset.pattern.permute.xlu0 0
          %1650 = vperm.xlu0 %1649, %v1592
          %v1651 = vpop.permute.xlu0 %1650
          %1654 = vset.pattern.permute.xlu0 0
          %1655 = vperm.xlu0 %1654, %v1593
          %v1656 = vpop.permute.xlu0 %1655
          %1659 = vset.pattern.permute.xlu0 0
          %1660 = vperm.xlu0 %1659, %v1594
          %v1661 = vpop.permute.xlu0 %1660
          %1664 = vset.pattern.permute.xlu0 0
          %1665 = vperm.xlu0 %1664, %v1595
          %v1666 = vpop.permute.xlu0 %1665
          %1669 = vset.pattern.permute.xlu0 0
          %1670 = vperm.xlu0 %1669, %v1596
          %v1671 = vpop.permute.xlu0 %1670
          %1674 = vset.pattern.permute.xlu0 0
          %1675 = vperm.xlu0 %1674, %v1597
          %v1676 = vpop.permute.xlu0 %1675
          %1679 = vset.pattern.permute.xlu0 0
          %1680 = vperm.xlu0 %1679, %v1598
          %v1681 = vpop.permute.xlu0 %1680
          %1684 = vset.pattern.permute.xlu0 0
          %1685 = vperm.xlu0 %1684, %v1599
          %v1686 = vpop.permute.xlu0 %1685
          %1689 = vset.pattern.permute.xlu0 0
          %1690 = vperm.xlu0 %1689, %v1600
          %v1691 = vpop.permute.xlu0 %1690
          %1694 = vset.pattern.permute.xlu0 0
          %1695 = vperm.xlu0 %1694, %v1601
          %v1696 = vpop.permute.xlu0 %1695
          %1699 = vset.pattern.permute.xlu0 0
          %1700 = vperm.xlu0 %1699, %v1602
          %v1701 = vpop.permute.xlu0 %1700
          %1704 = vset.pattern.permute.xlu0 0
          %1705 = vperm.xlu0 %1704, %v1603
          %v1706 = vpop.permute.xlu0 %1705
          %1709 = vset.pattern.permute.xlu0 0
          %1710 = vperm.xlu0 %1709, %v1604
          %v1711 = vpop.permute.xlu0 %1710
          %1714 = vset.pattern.permute.xlu0 0
          %1715 = vperm.xlu0 %1714, %v1605
          %v1716 = vpop.permute.xlu0 %1715
          %1719 = vset.pattern.permute.xlu0 0
          %1720 = vperm.xlu0 %1719, %v1606
          %v1721 = vpop.permute.xlu0 %1720
          %1724 = vset.pattern.permute.xlu0 0
          %1725 = vperm.xlu0 %1724, %v1607
          %v1726 = vpop.permute.xlu0 %1725
          %1729 = vset.pattern.permute.xlu0 0
          %1730 = vperm.xlu0 %1729, %v1608
          %v1731 = vpop.permute.xlu0 %1730
          %1734 = vset.pattern.permute.xlu0 0
          %1735 = vperm.xlu0 %1734, %v1609
          %v1736 = vpop.permute.xlu0 %1735
          %1739 = vset.pattern.permute.xlu0 0
          %1740 = vperm.xlu0 %1739, %v1610
          %v1741 = vpop.permute.xlu0 %1740
          %1744 = vset.pattern.permute.xlu0 0
          %1745 = vperm.xlu0 %1744, %v1611
          %v1746 = vpop.permute.xlu0 %1745
          %1749 = vset.pattern.permute.xlu0 0
          %1750 = vperm.xlu0 %1749, %v1612
          %v1751 = vpop.permute.xlu0 %1750
          %1754 = vset.pattern.permute.xlu0 0
          %1755 = vperm.xlu0 %1754, %v1613
          %v1756 = vpop.permute.xlu0 %1755
          %1759 = vset.pattern.permute.xlu0 0
          %1760 = vperm.xlu0 %1759, %v1614
          %v1761 = vpop.permute.xlu0 %1760
          %1764 = vset.pattern.permute.xlu0 0
          %1765 = vperm.xlu0 %1764, %v1615
          %v1766 = vpop.permute.xlu0 %1765
          %1769 = vset.pattern.permute.xlu0 0
          %1770 = vperm.xlu0 %1769, %v1616
          %v1771 = vpop.permute.xlu0 %1770
          %1774 = vset.pattern.permute.xlu0 0
          %1775 = vperm.xlu0 %1774, %v1617
          %v1776 = vpop.permute.xlu0 %1775
          %v1778 = vmul.f32 %v1554, %v1621
          %v1779 = vmul.f32 %v1555, %v1626
          %v1780 = vmul.f32 %v1556, %v1631
          %v1781 = vmul.f32 %v1557, %v1636
          %v1782 = vmul.f32 %v1558, %v1641
          %v1783 = vmul.f32 %v1559, %v1646
          %v1784 = vmul.f32 %v1560, %v1651
          %v1785 = vmul.f32 %v1561, %v1656
          %v1786 = vmul.f32 %v1562, %v1661
          %v1787 = vmul.f32 %v1563, %v1666
          %v1788 = vmul.f32 %v1564, %v1671
          %v1789 = vmul.f32 %v1565, %v1676
          %v1790 = vmul.f32 %v1566, %v1681
          %v1791 = vmul.f32 %v1567, %v1686
          %v1792 = vmul.f32 %v1568, %v1691
          %v1793 = vmul.f32 %v1569, %v1696
          %v1794 = vmul.f32 %v1570, %v1701
          %v1795 = vmul.f32 %v1571, %v1706
          %v1796 = vmul.f32 %v1572, %v1711
          %v1797 = vmul.f32 %v1573, %v1716
          %v1798 = vmul.f32 %v1574, %v1721
          %v1799 = vmul.f32 %v1575, %v1726
          %v1800 = vmul.f32 %v1576, %v1731
          %v1801 = vmul.f32 %v1577, %v1736
          %v1802 = vmul.f32 %v1578, %v1741
          %v1803 = vmul.f32 %v1579, %v1746
          %v1804 = vmul.f32 %v1580, %v1751
          %v1805 = vmul.f32 %v1581, %v1756
          %v1806 = vmul.f32 %v1582, %v1761
          %v1807 = vmul.f32 %v1583, %v1766
          %v1808 = vmul.f32 %v1584, %v1771
          %v1809 = vmul.f32 %v1585, %v1776
          %1810 = vst [vmem:[#allocation2] sm:$0xff] %v1778
          %1811 = vst [vmem:[#allocation2 + $0x10] sm:$0xff] %v1779
          %1812 = vst [vmem:[#allocation2 + $0x20] sm:$0xff] %v1780
          %1813 = vst [vmem:[#allocation2 + $0x30] sm:$0xff] %v1781
          %1814 = vst [vmem:[#allocation2 + $0x40] sm:$0xff] %v1782
          %1815 = vst [vmem:[#allocation2 + $0x50] sm:$0xff] %v1783
          %1816 = vst [vmem:[#allocation2 + $0x60] sm:$0xff] %v1784
          %1817 = vst [vmem:[#allocation2 + $0x70] sm:$0xff] %v1785
          %1818 = vst [vmem:[#allocation2 + $0x80] sm:$0xff] %v1786
          %1819 = vst [vmem:[#allocation2 + $0x90] sm:$0xff] %v1787
          %1820 = vst [vmem:[#allocation2 + $0xa0] sm:$0xff] %v1788
          %1821 = vst [vmem:[#allocation2 + $0xb0] sm:$0xff] %v1789
          %1822 = vst [vmem:[#allocation2 + $0xc0] sm:$0xff] %v1790
          %1823 = vst [vmem:[#allocation2 + $0xd0] sm:$0xff] %v1791
          %1824 = vst [vmem:[#allocation2 + $0xe0] sm:$0xff] %v1792
          %1825 = vst [vmem:[#allocation2 + $0xf0] sm:$0xff] %v1793
          %1826 = vst [vmem:[#allocation2 + $0x100] sm:$0xff] %v1794
          %1827 = vst [vmem:[#allocation2 + $0x110] sm:$0xff] %v1795
          %1828 = vst [vmem:[#allocation2 + $0x120] sm:$0xff] %v1796
          %1829 = vst [vmem:[#allocation2 + $0x130] sm:$0xff] %v1797
          %1830 = vst [vmem:[#allocation2 + $0x140] sm:$0xff] %v1798
          %1831 = vst [vmem:[#allocation2 + $0x150] sm:$0xff] %v1799
          %1832 = vst [vmem:[#allocation2 + $0x160] sm:$0xff] %v1800
          %1833 = vst [vmem:[#allocation2 + $0x170] sm:$0xff] %v1801
          %1834 = vst [vmem:[#allocation2 + $0x180] sm:$0xff] %v1802
          %1835 = vst [vmem:[#allocation2 + $0x190] sm:$0xff] %v1803
          %1836 = vst [vmem:[#allocation2 + $0x1a0] sm:$0xff] %v1804
          %1837 = vst [vmem:[#allocation2 + $0x1b0] sm:$0xff] %v1805
          %1838 = vst [vmem:[#allocation2 + $0x1c0] sm:$0xff] %v1806
          %1839 = vst [vmem:[#allocation2 + $0x1d0] sm:$0xff] %v1807
          %1840 = vst [vmem:[#allocation2 + $0x1e0] sm:$0xff] %v1808
          %1841 = vst [vmem:[#allocation2 + $0x1f0] sm:$0xff] %v1809
          %v1842 = vld [vmem:[#allocation2] sm:$0xff]
          %v1843 = vld [vmem:[#allocation2 + $0x8] sm:$0xff]
          %v1844 = vld [vmem:[#allocation2 + $0x10] sm:$0xff]
          %v1845 = vld [vmem:[#allocation2 + $0x18] sm:$0xff]
          %v1846 = vld [vmem:[#allocation2 + $0x20] sm:$0xff]
          %v1847 = vld [vmem:[#allocation2 + $0x28] sm:$0xff]
          %v1848 = vld [vmem:[#allocation2 + $0x30] sm:$0xff]
          %v1849 = vld [vmem:[#allocation2 + $0x38] sm:$0xff]
          %v1850 = vld [vmem:[#allocation2 + $0x40] sm:$0xff]
          %v1851 = vld [vmem:[#allocation2 + $0x48] sm:$0xff]
          %v1852 = vld [vmem:[#allocation2 + $0x50] sm:$0xff]
          %v1853 = vld [vmem:[#allocation2 + $0x58] sm:$0xff]
          %v1854 = vld [vmem:[#allocation2 + $0x60] sm:$0xff]
          %v1855 = vld [vmem:[#allocation2 + $0x68] sm:$0xff]
          %v1856 = vld [vmem:[#allocation2 + $0x70] sm:$0xff]
          %v1857 = vld [vmem:[#allocation2 + $0x78] sm:$0xff]
          %v1858 = vld [vmem:[#allocation2 + $0x80] sm:$0xff]
          %v1859 = vld [vmem:[#allocation2 + $0x88] sm:$0xff]
          %v1860 = vld [vmem:[#allocation2 + $0x90] sm:$0xff]
          %v1861 = vld [vmem:[#allocation2 + $0x98] sm:$0xff]
          %v1862 = vld [vmem:[#allocation2 + $0xa0] sm:$0xff]
          %v1863 = vld [vmem:[#allocation2 + $0xa8] sm:$0xff]
          %v1864 = vld [vmem:[#allocation2 + $0xb0] sm:$0xff]
          %v1865 = vld [vmem:[#allocation2 + $0xb8] sm:$0xff]
          %v1866 = vld [vmem:[#allocation2 + $0xc0] sm:$0xff]
          %v1867 = vld [vmem:[#allocation2 + $0xc8] sm:$0xff]
          %v1868 = vld [vmem:[#allocation2 + $0xd0] sm:$0xff]
          %v1869 = vld [vmem:[#allocation2 + $0xd8] sm:$0xff]
          %v1870 = vld [vmem:[#allocation2 + $0xe0] sm:$0xff]
          %v1871 = vld [vmem:[#allocation2 + $0xe8] sm:$0xff]
          %v1872 = vld [vmem:[#allocation2 + $0xf0] sm:$0xff]
          %v1873 = vld [vmem:[#allocation2 + $0xf8] sm:$0xff]
          %v1874 = vld [vmem:[#allocation2 + $0x100] sm:$0xff]
          %v1875 = vld [vmem:[#allocation2 + $0x108] sm:$0xff]
          %v1876 = vld [vmem:[#allocation2 + $0x110] sm:$0xff]
          %v1877 = vld [vmem:[#allocation2 + $0x118] sm:$0xff]
          %v1878 = vld [vmem:[#allocation2 + $0x120] sm:$0xff]
          %v1879 = vld [vmem:[#allocation2 + $0x128] sm:$0xff]
          %v1880 = vld [vmem:[#allocation2 + $0x130] sm:$0xff]
          %v1881 = vld [vmem:[#allocation2 + $0x138] sm:$0xff]
          %v1882 = vld [vmem:[#allocation2 + $0x140] sm:$0xff]
          %v1883 = vld [vmem:[#allocation2 + $0x148] sm:$0xff]
          %v1884 = vld [vmem:[#allocation2 + $0x150] sm:$0xff]
          %v1885 = vld [vmem:[#allocation2 + $0x158] sm:$0xff]
          %v1886 = vld [vmem:[#allocation2 + $0x160] sm:$0xff]
          %v1887 = vld [vmem:[#allocation2 + $0x168] sm:$0xff]
          %v1888 = vld [vmem:[#allocation2 + $0x170] sm:$0xff]
          %v1889 = vld [vmem:[#allocation2 + $0x178] sm:$0xff]
          %v1890 = vld [vmem:[#allocation2 + $0x180] sm:$0xff]
          %v1891 = vld [vmem:[#allocation2 + $0x188] sm:$0xff]
          %v1892 = vld [vmem:[#allocation2 + $0x190] sm:$0xff]
          %v1893 = vld [vmem:[#allocation2 + $0x198] sm:$0xff]
          %v1894 = vld [vmem:[#allocation2 + $0x1a0] sm:$0xff]
          %v1895 = vld [vmem:[#allocation2 + $0x1a8] sm:$0xff]
          %v1896 = vld [vmem:[#allocation2 + $0x1b0] sm:$0xff]
          %v1897 = vld [vmem:[#allocation2 + $0x1b8] sm:$0xff]
          %v1898 = vld [vmem:[#allocation2 + $0x1c0] sm:$0xff]
          %v1899 = vld [vmem:[#allocation2 + $0x1c8] sm:$0xff]
          %v1900 = vld [vmem:[#allocation2 + $0x1d0] sm:$0xff]
          %v1901 = vld [vmem:[#allocation2 + $0x1d8] sm:$0xff]
          %v1902 = vld [vmem:[#allocation2 + $0x1e0] sm:$0xff]
          %v1903 = vld [vmem:[#allocation2 + $0x1e8] sm:$0xff]
          %v1904 = vld [vmem:[#allocation2 + $0x1f0] sm:$0xff]
          %v1905 = vld [vmem:[#allocation2 + $0x1f8] sm:$0xff]
          %v1906 = vld [vmem:[#allocation8] sm:$0xff]
          %v1907 = vld [vmem:[#allocation8 + $0x8] sm:$0xff]
          %v1908 = vld [vmem:[#allocation8 + $0x10] sm:$0xff]
          %v1909 = vld [vmem:[#allocation8 + $0x18] sm:$0xff]
          %v1910 = vld [vmem:[#allocation8 + $0x20] sm:$0xff]
          %v1911 = vld [vmem:[#allocation8 + $0x28] sm:$0xff]
          %v1912 = vld [vmem:[#allocation8 + $0x30] sm:$0xff]
          %v1913 = vld [vmem:[#allocation8 + $0x38] sm:$0xff]
          %v1914 = vld [vmem:[#allocation8 + $0x40] sm:$0xff]
          %v1915 = vld [vmem:[#allocation8 + $0x48] sm:$0xff]
          %v1916 = vld [vmem:[#allocation8 + $0x50] sm:$0xff]
          %v1917 = vld [vmem:[#allocation8 + $0x58] sm:$0xff]
          %v1918 = vld [vmem:[#allocation8 + $0x60] sm:$0xff]
          %v1919 = vld [vmem:[#allocation8 + $0x68] sm:$0xff]
          %v1920 = vld [vmem:[#allocation8 + $0x70] sm:$0xff]
          %v1921 = vld [vmem:[#allocation8 + $0x78] sm:$0xff]
          %v1922 = vld [vmem:[#allocation8 + $0x80] sm:$0xff]
          %v1923 = vld [vmem:[#allocation8 + $0x88] sm:$0xff]
          %v1924 = vld [vmem:[#allocation8 + $0x90] sm:$0xff]
          %v1925 = vld [vmem:[#allocation8 + $0x98] sm:$0xff]
          %v1926 = vld [vmem:[#allocation8 + $0xa0] sm:$0xff]
          %v1927 = vld [vmem:[#allocation8 + $0xa8] sm:$0xff]
          %v1928 = vld [vmem:[#allocation8 + $0xb0] sm:$0xff]
          %v1929 = vld [vmem:[#allocation8 + $0xb8] sm:$0xff]
          %v1930 = vld [vmem:[#allocation8 + $0xc0] sm:$0xff]
          %v1931 = vld [vmem:[#allocation8 + $0xc8] sm:$0xff]
          %v1932 = vld [vmem:[#allocation8 + $0xd0] sm:$0xff]
          %v1933 = vld [vmem:[#allocation8 + $0xd8] sm:$0xff]
          %v1934 = vld [vmem:[#allocation8 + $0xe0] sm:$0xff]
          %v1935 = vld [vmem:[#allocation8 + $0xe8] sm:$0xff]
          %v1936 = vld [vmem:[#allocation8 + $0xf0] sm:$0xff]
          %v1937 = vld [vmem:[#allocation8 + $0xf8] sm:$0xff]
          %v1938 = vld [vmem:[%s5] sm:$0x1]
          %v1940 = vperm.slane %v1938, 0
          %1942 = vmatpush.msra.mxu0 %v1921
          %1943 = vmatpush.msra.mxu0 %v1920
          %1944 = vmatpush.msra.mxu0 %v1919
          %1945 = vmatpush.msra.mxu0 %v1918
          %1946 = vmatpush.msra.mxu0 %v1917
          %1947 = vmatpush.msra.mxu0 %v1916
          %1948 = vmatpush.msra.mxu0 %v1915
          %1949 = vmatpush.msra.mxu0 %v1914
          %1950 = vmatpush.msra.mxu0 %v1913
          %1951 = vmatpush.msra.mxu0 %v1912
          %1952 = vmatpush.msra.mxu0 %v1911
          %1953 = vmatpush.msra.mxu0 %v1910
          %1954 = vmatpush.msra.mxu0 %v1909
          %1955 = vmatpush.msra.mxu0 %v1908
          %1956 = vmatpush.msra.mxu0 %v1907
          %1957 = vmatpush.msra.mxu0 %v1906
          %1958 = vmatmul.f32.gmra.mxu0 %v1842
          %v1959 = vpop.f32.mrf.mxu0
          %v1960 = vadd.f32 %v1940, %v1959
          %1961 = vmatmul.f32.gmra.mxu0 %v1844
          %v1962 = vpop.f32.mrf.mxu0
          %v1963 = vadd.f32 %v1940, %v1962
          %1964 = vmatmul.f32.gmra.mxu0 %v1846
          %v1965 = vpop.f32.mrf.mxu0
          %v1966 = vadd.f32 %v1940, %v1965
          %1967 = vmatmul.f32.gmra.mxu0 %v1848
          %v1968 = vpop.f32.mrf.mxu0
          %v1969 = vadd.f32 %v1940, %v1968
          %1970 = vmatmul.f32.gmra.mxu0 %v1850
          %v1971 = vpop.f32.mrf.mxu0
          %v1972 = vadd.f32 %v1940, %v1971
          %1973 = vmatmul.f32.gmra.mxu0 %v1852
          %v1974 = vpop.f32.mrf.mxu0
          %v1975 = vadd.f32 %v1940, %v1974
          %1976 = vmatmul.f32.gmra.mxu0 %v1854
          %v1977 = vpop.f32.mrf.mxu0
          %v1978 = vadd.f32 %v1940, %v1977
          %1979 = vmatmul.f32.gmra.mxu0 %v1856
          %v1980 = vpop.f32.mrf.mxu0
          %v1981 = vadd.f32 %v1940, %v1980
          %1982 = vmatmul.f32.gmra.mxu0 %v1858
          %v1983 = vpop.f32.mrf.mxu0
          %v1984 = vadd.f32 %v1940, %v1983
          %1985 = vmatmul.f32.gmra.mxu0 %v1860
          %v1986 = vpop.f32.mrf.mxu0
          %v1987 = vadd.f32 %v1940, %v1986
          %1988 = vmatmul.f32.gmra.mxu0 %v1862
          %v1989 = vpop.f32.mrf.mxu0
          %v1990 = vadd.f32 %v1940, %v1989
          %1991 = vmatmul.f32.gmra.mxu0 %v1864
          %v1992 = vpop.f32.mrf.mxu0
          %v1993 = vadd.f32 %v1940, %v1992
          %1994 = vmatmul.f32.gmra.mxu0 %v1866
          %v1995 = vpop.f32.mrf.mxu0
          %v1996 = vadd.f32 %v1940, %v1995
          %1997 = vmatmul.f32.gmra.mxu0 %v1868
          %v1998 = vpop.f32.mrf.mxu0
          %v1999 = vadd.f32 %v1940, %v1998
          %2000 = vmatmul.f32.gmra.mxu0 %v1870
          %v2001 = vpop.f32.mrf.mxu0
          %v2002 = vadd.f32 %v1940, %v2001
          %2003 = vmatmul.f32.gmra.mxu0 %v1872
          %v2004 = vpop.f32.mrf.mxu0
          %v2005 = vadd.f32 %v1940, %v2004
          %2006 = vmatmul.f32.gmra.mxu0 %v1874
          %v2007 = vpop.f32.mrf.mxu0
          %v2008 = vadd.f32 %v1940, %v2007
          %2009 = vmatmul.f32.gmra.mxu0 %v1876
          %v2010 = vpop.f32.mrf.mxu0
          %v2011 = vadd.f32 %v1940, %v2010
          %2012 = vmatmul.f32.gmra.mxu0 %v1878
          %v2013 = vpop.f32.mrf.mxu0
          %v2014 = vadd.f32 %v1940, %v2013
          %2015 = vmatmul.f32.gmra.mxu0 %v1880
          %v2016 = vpop.f32.mrf.mxu0
          %v2017 = vadd.f32 %v1940, %v2016
          %2018 = vmatmul.f32.gmra.mxu0 %v1882
          %v2019 = vpop.f32.mrf.mxu0
          %v2020 = vadd.f32 %v1940, %v2019
          %2021 = vmatmul.f32.gmra.mxu0 %v1884
          %v2022 = vpop.f32.mrf.mxu0
          %v2023 = vadd.f32 %v1940, %v2022
          %2024 = vmatmul.f32.gmra.mxu0 %v1886
          %v2025 = vpop.f32.mrf.mxu0
          %v2026 = vadd.f32 %v1940, %v2025
          %2027 = vmatmul.f32.gmra.mxu0 %v1888
          %v2028 = vpop.f32.mrf.mxu0
          %v2029 = vadd.f32 %v1940, %v2028
          %2030 = vmatmul.f32.gmra.mxu0 %v1890
          %v2031 = vpop.f32.mrf.mxu0
          %v2032 = vadd.f32 %v1940, %v2031
          %2033 = vmatmul.f32.gmra.mxu0 %v1892
          %v2034 = vpop.f32.mrf.mxu0
          %v2035 = vadd.f32 %v1940, %v2034
          %2036 = vmatmul.f32.gmra.mxu0 %v1894
          %v2037 = vpop.f32.mrf.mxu0
          %v2038 = vadd.f32 %v1940, %v2037
          %2039 = vmatmul.f32.gmra.mxu0 %v1896
          %v2040 = vpop.f32.mrf.mxu0
          %v2041 = vadd.f32 %v1940, %v2040
          %2042 = vmatmul.f32.gmra.mxu0 %v1898
          %v2043 = vpop.f32.mrf.mxu0
          %v2044 = vadd.f32 %v1940, %v2043
          %2045 = vmatmul.f32.gmra.mxu0 %v1900
          %v2046 = vpop.f32.mrf.mxu0
          %v2047 = vadd.f32 %v1940, %v2046
          %2048 = vmatmul.f32.gmra.mxu0 %v1902
          %v2049 = vpop.f32.mrf.mxu0
          %v2050 = vadd.f32 %v1940, %v2049
          %2051 = vmatmul.f32.gmra.mxu0 %v1904
          %v2052 = vpop.f32.mrf.mxu0
          %v2053 = vadd.f32 %v1940, %v2052
          %2054 = vdwg.mxu0
          %2055 = vmatpush.msra.mxu0 %v1937
          %2056 = vmatpush.msra.mxu0 %v1936
          %2057 = vmatpush.msra.mxu0 %v1935
          %2058 = vmatpush.msra.mxu0 %v1934
          %2059 = vmatpush.msra.mxu0 %v1933
          %2060 = vmatpush.msra.mxu0 %v1932
          %2061 = vmatpush.msra.mxu0 %v1931
          %2062 = vmatpush.msra.mxu0 %v1930
          %2063 = vmatpush.msra.mxu0 %v1929
          %2064 = vmatpush.msra.mxu0 %v1928
          %2065 = vmatpush.msra.mxu0 %v1927
          %2066 = vmatpush.msra.mxu0 %v1926
          %2067 = vmatpush.msra.mxu0 %v1925
          %2068 = vmatpush.msra.mxu0 %v1924
          %2069 = vmatpush.msra.mxu0 %v1923
          %2070 = vmatpush.msra.mxu0 %v1922
          %2071 = vmatmul.f32.gmra.mxu0 %v1843
          %v2072 = vpop.f32.mrf.mxu0
          %v2073 = vadd.f32 %v1960, %v2072
          %2074 = vmatmul.f32.gmra.mxu0 %v1845
          %v2075 = vpop.f32.mrf.mxu0
          %v2076 = vadd.f32 %v1963, %v2075
          %2077 = vmatmul.f32.gmra.mxu0 %v1847
          %v2078 = vpop.f32.mrf.mxu0
          %v2079 = vadd.f32 %v1966, %v2078
          %2080 = vmatmul.f32.gmra.mxu0 %v1849
          %v2081 = vpop.f32.mrf.mxu0
          %v2082 = vadd.f32 %v1969, %v2081
          %2083 = vmatmul.f32.gmra.mxu0 %v1851
          %v2084 = vpop.f32.mrf.mxu0
          %v2085 = vadd.f32 %v1972, %v2084
          %2086 = vmatmul.f32.gmra.mxu0 %v1853
          %v2087 = vpop.f32.mrf.mxu0
          %v2088 = vadd.f32 %v1975, %v2087
          %2089 = vmatmul.f32.gmra.mxu0 %v1855
          %v2090 = vpop.f32.mrf.mxu0
          %v2091 = vadd.f32 %v1978, %v2090
          %2092 = vmatmul.f32.gmra.mxu0 %v1857
          %v2093 = vpop.f32.mrf.mxu0
          %v2094 = vadd.f32 %v1981, %v2093
          %2095 = vmatmul.f32.gmra.mxu0 %v1859
          %v2096 = vpop.f32.mrf.mxu0
          %v2097 = vadd.f32 %v1984, %v2096
          %2098 = vmatmul.f32.gmra.mxu0 %v1861
          %v2099 = vpop.f32.mrf.mxu0
          %v2100 = vadd.f32 %v1987, %v2099
          %2101 = vmatmul.f32.gmra.mxu0 %v1863
          %v2102 = vpop.f32.mrf.mxu0
          %v2103 = vadd.f32 %v1990, %v2102
          %2104 = vmatmul.f32.gmra.mxu0 %v1865
          %v2105 = vpop.f32.mrf.mxu0
          %v2106 = vadd.f32 %v1993, %v2105
          %2107 = vmatmul.f32.gmra.mxu0 %v1867
          %v2108 = vpop.f32.mrf.mxu0
          %v2109 = vadd.f32 %v1996, %v2108
          %2110 = vmatmul.f32.gmra.mxu0 %v1869
          %v2111 = vpop.f32.mrf.mxu0
          %v2112 = vadd.f32 %v1999, %v2111
          %2113 = vmatmul.f32.gmra.mxu0 %v1871
          %v2114 = vpop.f32.mrf.mxu0
          %v2115 = vadd.f32 %v2002, %v2114
          %2116 = vmatmul.f32.gmra.mxu0 %v1873
          %v2117 = vpop.f32.mrf.mxu0
          %v2118 = vadd.f32 %v2005, %v2117
          %2119 = vmatmul.f32.gmra.mxu0 %v1875
          %v2120 = vpop.f32.mrf.mxu0
          %v2121 = vadd.f32 %v2008, %v2120
          %2122 = vmatmul.f32.gmra.mxu0 %v1877
          %v2123 = vpop.f32.mrf.mxu0
          %v2124 = vadd.f32 %v2011, %v2123
          %2125 = vmatmul.f32.gmra.mxu0 %v1879
          %v2126 = vpop.f32.mrf.mxu0
          %v2127 = vadd.f32 %v2014, %v2126
          %2128 = vmatmul.f32.gmra.mxu0 %v1881
          %v2129 = vpop.f32.mrf.mxu0
          %v2130 = vadd.f32 %v2017, %v2129
          %2131 = vmatmul.f32.gmra.mxu0 %v1883
          %v2132 = vpop.f32.mrf.mxu0
          %v2133 = vadd.f32 %v2020, %v2132
          %2134 = vmatmul.f32.gmra.mxu0 %v1885
          %v2135 = vpop.f32.mrf.mxu0
          %v2136 = vadd.f32 %v2023, %v2135
          %2137 = vmatmul.f32.gmra.mxu0 %v1887
          %v2138 = vpop.f32.mrf.mxu0
          %v2139 = vadd.f32 %v2026, %v2138
          %2140 = vmatmul.f32.gmra.mxu0 %v1889
          %v2141 = vpop.f32.mrf.mxu0
          %v2142 = vadd.f32 %v2029, %v2141
          %2143 = vmatmul.f32.gmra.mxu0 %v1891
          %v2144 = vpop.f32.mrf.mxu0
          %v2145 = vadd.f32 %v2032, %v2144
          %2146 = vmatmul.f32.gmra.mxu0 %v1893
          %v2147 = vpop.f32.mrf.mxu0
          %v2148 = vadd.f32 %v2035, %v2147
          %2149 = vmatmul.f32.gmra.mxu0 %v1895
          %v2150 = vpop.f32.mrf.mxu0
          %v2151 = vadd.f32 %v2038, %v2150
          %2152 = vmatmul.f32.gmra.mxu0 %v1897
          %v2153 = vpop.f32.mrf.mxu0
          %v2154 = vadd.f32 %v2041, %v2153
          %2155 = vmatmul.f32.gmra.mxu0 %v1899
          %v2156 = vpop.f32.mrf.mxu0
          %v2157 = vadd.f32 %v2044, %v2156
          %2158 = vmatmul.f32.gmra.mxu0 %v1901
          %v2159 = vpop.f32.mrf.mxu0
          %v2160 = vadd.f32 %v2047, %v2159
          %2161 = vmatmul.f32.gmra.mxu0 %v1903
          %v2162 = vpop.f32.mrf.mxu0
          %v2163 = vadd.f32 %v2050, %v2162
          %2164 = vmatmul.f32.gmra.mxu0 %v1905
          %v2165 = vpop.f32.mrf.mxu0
          %v2166 = vadd.f32 %v2053, %v2165
          %2167 = vdwg.mxu0
          %2168 = vst [vmem:[%s369] sm:$0xff] %v2073
          %2169 = vst [vmem:[%s369 + $0x8] sm:$0xff] %v2076
          %2170 = vst [vmem:[%s369 + $0x10] sm:$0xff] %v2079
          %2171 = vst [vmem:[%s369 + $0x18] sm:$0xff] %v2082
          %2172 = vst [vmem:[%s369 + $0x20] sm:$0xff] %v2085
          %2173 = vst [vmem:[%s369 + $0x28] sm:$0xff] %v2088
          %2174 = vst [vmem:[%s369 + $0x30] sm:$0xff] %v2091
          %2175 = vst [vmem:[%s369 + $0x38] sm:$0xff] %v2094
          %2176 = vst [vmem:[%s369 + $0x40] sm:$0xff] %v2097
          %2177 = vst [vmem:[%s369 + $0x48] sm:$0xff] %v2100
          %2178 = vst [vmem:[%s369 + $0x50] sm:$0xff] %v2103
          %2179 = vst [vmem:[%s369 + $0x58] sm:$0xff] %v2106
          %2180 = vst [vmem:[%s369 + $0x60] sm:$0xff] %v2109
          %2181 = vst [vmem:[%s369 + $0x68] sm:$0xff] %v2112
          %2182 = vst [vmem:[%s369 + $0x70] sm:$0xff] %v2115
          %2183 = vst [vmem:[%s369 + $0x78] sm:$0xff] %v2118
          %2184 = vst [vmem:[%s369 + $0x80] sm:$0xff] %v2121
          %2185 = vst [vmem:[%s369 + $0x88] sm:$0xff] %v2124
          %2186 = vst [vmem:[%s369 + $0x90] sm:$0xff] %v2127
          %2187 = vst [vmem:[%s369 + $0x98] sm:$0xff] %v2130
          %2188 = vst [vmem:[%s369 + $0xa0] sm:$0xff] %v2133
          %2189 = vst [vmem:[%s369 + $0xa8] sm:$0xff] %v2136
          %2190 = vst [vmem:[%s369 + $0xb0] sm:$0xff] %v2139
          %2191 = vst [vmem:[%s369 + $0xb8] sm:$0xff] %v2142
          %2192 = vst [vmem:[%s369 + $0xc0] sm:$0xff] %v2145
          %2193 = vst [vmem:[%s369 + $0xc8] sm:$0xff] %v2148
          %2194 = vst [vmem:[%s369 + $0xd0] sm:$0xff] %v2151
          %2195 = vst [vmem:[%s369 + $0xd8] sm:$0xff] %v2154
          %2196 = vst [vmem:[%s369 + $0xe0] sm:$0xff] %v2157
          %2197 = vst [vmem:[%s369 + $0xe8] sm:$0xff] %v2160
          %2198 = vst [vmem:[%s369 + $0xf0] sm:$0xff] %v2163
          %2199 = vst [vmem:[%s369 + $0xf8] sm:$0xff] %v2166
        $region64: #{tpu_custom_call.1} parent=43 // pred_fallthru
          _
        %s2200 = sand.u32 %s192, 1
        %s2201 = scalar_lea.sflag [#allocation5], %s2200
        %s2202 = sand.u32 %s192, 1
        %s2203 = smul.addr %s2202, 256
        %s2204 = scalar_lea.vmem [#allocation9], %s2203
        // Predicated region
        $region65: #{tpu_custom_call.1} parent=43 // pred_check
          %p2205 = pneg %p202
        $region66: #{tpu_custom_call.1} parent=43 // pred_check_branch
          %2207 = sbr.rel (%p2205) target = $region68
        $region67: #{tpu_custom_call.1} parent=43 // pred_region
          %s2208 = smul.u32 32, %s28
          %2210 = vsyncadd %s2201, 0
          %s2211 = smul.addr %s2208, 8
          %s2212 = scalar_lea.hbm %s6, %s2211
          %s2213 = sshll.u32 %s2204, 4
          %s2214 = int_to_ptr.vmem [resolvable:$true] %s2213
          %s2215 = sshll.u32 %s2212, 4
          %s2216 = int_to_ptr.hbm [resolvable:$true] %s2215
          %2221 = dma.vmem_to_hbm [thread:$0]  %s2214, 4096, %s2216, %s2201, 128, 128, 8
        $region68: #{tpu_custom_call.1} parent=43 // pred_fallthru
          _
      $region44: #{tpu_custom_call.1} parent=5 // pred_fallthru
        _
      %p2222 = scmp.le.s32.totalorder 2, %s19
      // Predicated region
      $region69: #{tpu_custom_call.1} parent=5 // pred_check
        %p2223 = pneg %p2222
      $region70: #{tpu_custom_call.1} parent=5 // pred_check_branch
        %2225 = sbr.rel (%p2223) target = $region72
      $region71: #{tpu_custom_call.1} parent=5 // pred_region
        %s2226 = ssub.s32 %s19, 2
        // Predicated region
        $region73: #{tpu_custom_call.1} parent=71 // pred_check
          %p2227 = pneg %p208
        $region74: #{tpu_custom_call.1} parent=71 // pred_check_branch
          %2229 = sbr.rel (%p2227) target = $region76
        $region75: #{tpu_custom_call.1} parent=71 // pred_region
          %s2230 = sand.u32 %s193, 1
          %s2231 = scalar_lea.sflag [#allocation5], %s2230
          %s2232 = sand.u32 %s193, 1
          %s2233 = smul.addr %s2232, 256
          %s2234 = scalar_lea.vmem [#allocation9], %s2233
          %2236 = dma.done %s2231, 4096
        $region76: #{tpu_custom_call.1} parent=71 // pred_fallthru
          _
      $region72: #{tpu_custom_call.1} parent=5 // pred_fallthru
        _
    $region6: #{tpu_custom_call.1} parent=1 // loop_footer
      %s23 = sadd.s32 1, %s19
    $region7: #{tpu_custom_call.1} parent=1 // loop_footer_branch
      %18 = sbr.rel target = $region3
    $region8: #{tpu_custom_call.1} parent=1 // loop_exit
      _
    %2237 = vsyncpa [#allocation4], 1
    %s2238 = scalar_lea.sflag [#allocation4], 1
    %2239 = vsyncpa %s2238, 1
    %2240 = vsyncpa [#allocation7], 1
    %s2241 = scalar_lea.sflag [#allocation7], 1
    %2242 = vsyncpa %s2241, 1
    %2243 = vsyncpa [#allocation5], 1
    %s2244 = scalar_lea.sflag [#allocation5], 1
    %2245 = vsyncpa %s2244, 1

</llo_original>
